<compile_context>
chip_gen: v6e
topology: v6e:2x2x1
jax: 0.10.0
libtpu: 0.0.40
codegen_flags: <defaults>
</compile_context>

<pallas_src>
import jax
import jax.numpy as jnp
from jax.experimental import pallas as pl
from jax.experimental.pallas import tpu as pltpu

EPS = 1e-5  # PyTorch BatchNorm2d default


# ----------------------------------------------------------------------------
# Fused residual-block kernel
# ----------------------------------------------------------------------------
def _make_block_kernel(stride, c_in, c_out, hc, wc, use_bypass, out_dtype):
    """Kernel operating on flattened (C, hc*wc) canvases, one batch element per grid step."""
    s = stride
    lc = hc * wc
    m = wc + 1                      # margin (elements) on each side of flattened canvases
    taps = [(kh, kw) for kh in range(3) for kw in range(3)]

    def kernel(mask_ref, xph_ref, w1_ref, b1_ref, w2_ref, b2_ref, *rest):
        if use_bypass:
            wb_ref, bb_ref, out_ref, h1_ref = rest
        else:
            out_ref, h1_ref = rest

        mask = mask_ref[...]                                          # (1, lc) interior mask

        # ---- conv1 (3x3, stride s) + BN1 + ReLU : 9 shifted matmuls, f32 accumulation ----
        acc1 = jnp.zeros((c_out, lc), jnp.float32)
        for t, (kh, kw) in enumerate(taps):
            ph = (kh % s) * s + (kw % s)                              # space-to-depth phase
            d = (kh // s - 1) * wc + (kw // s - 1)                    # constant lane shift
            xwin = xph_ref[0, ph, :, m + d: m + d + lc]               # (c_in, lc)
            acc1 = acc1 + jnp.dot(w1_ref[t], xwin,
                                  preferred_element_type=jnp.float32)
        # mask zeroes the canvas border so it acts as conv2's zero padding
        h1 = jnp.maximum(acc1 + b1_ref[...], 0.0) * mask              # (c_out, lc)

        # stage h1 on a zero-margined VMEM canvas (never leaves VMEM)
        h1_ref[...] = jnp.zeros_like(h1_ref)
        h1_ref[:, m: m + lc] = h1

        # ---- conv2 (3x3, stride 1) + BN2 ----
        acc2 = jnp.zeros((c_out, lc), jnp.float32)
        for t, (kh, kw) in enumerate(taps):
            d = (kh - 1) * wc + (kw - 1)
            acc2 = acc2 + jnp.dot(w2_ref[t], h1_ref[:, m + d: m + d + lc],
                                  preferred_element_type=jnp.float32)
        res = acc2 + b2_ref[...]

        # ---- bypass ----
        if use_bypass:
            phb = (1 % s) * s + (1 % s)
            db = (1 // s - 1) * wc + (1 // s - 1)
            xb = xph_ref[0, phb, :, m + db: m + db + lc]              # (c_in, lc)
            byp = jnp.dot(wb_ref[...], xb,
                          preferred_element_type=jnp.float32) + bb_ref[...]
        else:
            byp = xph_ref[0, 0, :, m: m + lc]                         # identity (s=1, c_in==c_out)

        # residual add + final ReLU, lane-dense store (lane axis = hc*wc)
        out_ref[0] = jnp.maximum(res + byp, 0.0).astype(out_dtype)

    return kernel


# ----------------------------------------------------------------------------
# Parameter prep: BN folding (scale folded into weights) + per-tap weight packing
# ----------------------------------------------------------------------------
def _fold_bn(conv_bias, gamma, beta, mean, var, eps=EPS):
    scale = gamma / jnp.sqrt(var + eps)
    bias = (conv_bias - mean) * scale + beta
    return scale, bias


def _pack3x3(w_oihw, scale):
    """(Cout, Cin, 3, 3) * per-Cout scale -> (9, Cout, Cin), tap order t = kh*3 + kw."""
    co, ci = w_oihw.shape[0], w_oihw.shape[1]
    w = w_oihw * scale[:, None, None, None]
    return jnp.transpose(w, (2, 3, 0, 1)).reshape(9, co, ci).astype(jnp.float32)


# ----------------------------------------------------------------------------
# ResidualBlock forward (single fused Pallas call)
# ----------------------------------------------------------------------------
def residual_block_forward(x_nchw, params, stride: int, use_bypass: bool):
    N, c_in, H, W = x_nchw.shape
    c_out = params["w1"].shape[0]
    s = stride
    if not use_bypass:
        assert s == 1 and c_in == c_out, "identity bypass requires stride=1 and Cin==Cout"

    Ho = (H + 2 - 3) // s + 1
    Wo = (W + 2 - 3) // s + 1
    hc, wc = Ho + 2, Wo + 2          # output canvas (1-pixel halo for conv2 padding)
    lc = hc * wc
    m = wc + 1                       # flattened-canvas margin
    ltot = lc + 2 * m
    n_ph = s * s

    # ---- wrapper-side prep: one pass over the input, no 9x im2col blow-up ----
    # zero-pad (conv padding), then space-to-depth phase split onto (hc, wc) canvases,
    # flatten row-major and add margins so every conv tap is a constant lane shift.
    xpad = jnp.pad(x_nchw, ((0, 0), (0, 0), (1, 1), (1, 1)))
    xpad = jnp.pad(xpad, ((0, 0), (0, 0),
                          (0, s * hc - (H + 2)), (0, s * wc - (W + 2))))
    xph = xpad.reshape(N, c_in, hc, s, wc, s)
    xph = jnp.transpose(xph, (0, 3, 5, 1, 2, 4)).reshape(N, n_ph, c_in, lc)
    xph = jnp.pad(xph, ((0, 0), (0, 0), (0, 0), (m, m)))

    # interior mask of the canvas (1 on valid output pixels, 0 on the halo border)
    mask = jnp.zeros((hc, wc), jnp.float32).at[1:1 + Ho, 1:1 + Wo].set(1.0).reshape(1, lc)

    # fold BN into weights / biases
    s1, b1 = _fold_bn(params["b1"], params["g1"], params["beta1"], params["m1"], params["v1"])
    s2, b2 = _fold_bn(params["b2"], params["g2"], params["beta2"], params["m2"], params["v2"])
    w1 = _pack3x3(params["w1"], s1)                                   # (9, c_out, c_in)
    w2 = _pack3x3(params["w2"], s2)                                   # (9, c_out, c_out)
    b1 = b1.reshape(c_out, 1).astype(jnp.float32)
    b2 = b2.reshape(c_out, 1).astype(jnp.float32)

    args = [mask, xph, w1, b1, w2, b2]
    in_specs = [
        pl.BlockSpec((1, lc), lambda n: (0, 0)),
        pl.BlockSpec((1, n_ph, c_in, ltot), lambda n: (n, 0, 0, 0)),
        pl.BlockSpec((9, c_out, c_in), lambda n: (0, 0, 0)),
        pl.BlockSpec((c_out, 1), lambda n: (0, 0)),
        pl.BlockSpec((9, c_out, c_out), lambda n: (0, 0, 0)),
        pl.BlockSpec((c_out, 1), lambda n: (0, 0)),
    ]
    if use_bypass:
        sb, bb = _fold_bn(params["bb"], params["gb"], params["betab"], params["mb"], params["vb"])
        wb = (params["wb"][:, :, 0, 0] * sb[:, None]).astype(jnp.float32)   # (c_out, c_in)
        bb = bb.reshape(c_out, 1).astype(jnp.float32)
        args += [wb, bb]
        in_specs += [pl.BlockSpec((c_out, c_in), lambda n: (0, 0)),
                     pl.BlockSpec((c_out, 1), lambda n: (0, 0))]

    kernel = _make_block_kernel(s, c_in, c_out, hc, wc, use_bypass, x_nchw.dtype)

    out_canvas = pl.pallas_call(
        kernel,
        out_shape=jax.ShapeDtypeStruct((N, c_out, lc), x_nchw.dtype),
        grid=(N,),
        in_specs=in_specs,
        out_specs=pl.BlockSpec((1, c_out, lc), lambda n: (n, 0, 0)),
        scratch_shapes=[pltpu.VMEM((c_out, lc + 2 * m), jnp.float32)],
        compiler_params=pltpu.CompilerParams(dimension_semantics=("parallel",)),
    )(*args)

    # strip the canvas halo -> NCHW output (channels-first layout preserved end to end)
    out = out_canvas.reshape(N, c_out, hc, wc)[:, :, 1:1 + Ho, 1:1 + Wo]
    return out


# ----------------------------------------------------------------------------
# Pure-JAX reference (NCHW, lax.conv at HIGHEST precision) for correctness check
# ----------------------------------------------------------------------------
def _ref_conv(x, w, b, stride, padding):
    y = jax.lax.conv_general_dilated(
        x, w, (stride, stride), [(padding, padding), (padding, padding)],
        dimension_numbers=("NCHW", "OIHW", "NCHW"),
        precision=jax.lax.Precision.HIGHEST)
    return y + b[None, :, None, None]


def _ref_bn(y, gamma, beta, mean, var, eps=EPS):
    return ((y - mean[None, :, None, None]) / jnp.sqrt(var[None, :, None, None] + eps)
            * gamma[None, :, None, None] + beta[None, :, None, None])


def reference_forward(x, p, stride, use_bypass):
    h = _ref_conv(x, p["w1"], p["b1"], stride, 1)
    h = jnp.maximum(_ref_bn(h, p["g1"], p["beta1"], p["m1"], p["v1"]), 0.0)
    h = _ref_conv(h, p["w2"], p["b2"], 1, 1)
    res = _ref_bn(h, p["g2"], p["beta2"], p["m2"], p["v2"])
    if use_bypass:
        byp = _ref_conv(x, p["wb"], p["bb"], stride, 0)
        byp = _ref_bn(byp, p["gb"], p["betab"], p["mb"], p["vb"])
    else:
        byp = x
    return jnp.maximum(res + byp, 0.0)


# ----------------------------------------------------------------------------
# Deterministic synthetic parameters
# ----------------------------------------------------------------------------
def make_params(key, c_in, c_out, use_bypass):
    ks = jax.random.split(key, 16)

    def bn(k0, k1, k2, k3, c):
        return (1.0 + 0.1 * jax.random.normal(k0, (c,), jnp.float32),             # gamma
                0.05 * jax.random.normal(k1, (c,), jnp.float32),                  # beta
                0.1 * jax.random.normal(k2, (c,), jnp.float32),                   # running mean
                0.5 + 0.1 * jnp.abs(jax.random.normal(k3, (c,), jnp.float32)))    # running var

    p = {}
    p["w1"] = 0.1 * jax.random.normal(ks[0], (c_out, c_in, 3, 3), jnp.float32)
    p["b1"] = 0.05 * jax.random.normal(ks[1], (c_out,), jnp.float32)
    p["g1"], p["beta1"], p["m1"], p["v1"] = bn(ks[2], ks[3], ks[4], ks[5], c_out)
    p["w2"] = 0.1 * jax.random.normal(ks[6], (c_out, c_out, 3, 3), jnp.float32)
    p["b2"] = 0.05 * jax.random.normal(ks[7], (c_out,), jnp.float32)
    p["g2"], p["beta2"], p["m2"], p["v2"] = bn(ks[8], ks[9], ks[10], ks[11], c_out)
    if use_bypass:
        p["wb"] = 0.1 * jax.random.normal(ks[12], (c_out, c_in, 1, 1), jnp.float32)
        p["bb"] = 0.05 * jax.random.normal(ks[13], (c_out,), jnp.float32)
        p["gb"], p["betab"], p["mb"], p["vb"] = bn(ks[14], ks[15], ks[12], ks[13], c_out)
    return p


if __name__ == "__main__":
    key = jax.random.PRNGKey(0)
    kx, kp1, kp2 = jax.random.split(key, 3)

    # input: NCHW, batch=2, channels=4, spatial=16x16
    x = jax.random.normal(kx, (2, 4, 16, 16), jnp.float32)

    # Case 1: downsampling block with conv bypass (channels 4 -> 8, stride 2)
    params1 = make_params(kp1, c_in=4, c_out=8, use_bypass=True)
    out1 = jax.block_until_ready(residual_block_forward(x, params1, stride=2, use_bypass=True))
    ref1 = reference_forward(x, params1, stride=2, use_bypass=True)
    assert out1.shape == (2, 8, 8, 8), out1.shape
    assert jnp.allclose(out1, ref1, atol=1e-3, rtol=1e-3), \
        f"max err {jnp.max(jnp.abs(out1 - ref1))}"

    # Case 2: identity-bypass block (channels 4 -> 4, stride 1)
    params2 = make_params(kp2, c_in=4, c_out=4, use_bypass=False)
    out2 = jax.block_until_ready(residual_block_forward(x, params2, stride=1, use_bypass=False))
    ref2 = reference_forward(x, params2, stride=1, use_bypass=False)
    assert out2.shape == (2, 4, 16, 16), out2.shape
    assert jnp.allclose(out2, ref2, atol=1e-3, rtol=1e-3), \
        f"max err {jnp.max(jnp.abs(out2 - ref2))}"

    print("KERNEL_OK")
</pallas_src>

<mosaic_0001>
module attributes {stable_mosaic.version = 11 : i64} {
  func.func @kernel(%arg0: i32, %arg1: memref<1x100xf32, #tpu.memory_space<vmem>>, %arg2: memref<1x4x4x122xf32, #tpu.memory_space<vmem>>, %arg3: memref<9x8x4xf32, #tpu.memory_space<vmem>>, %arg4: memref<8x1xf32, #tpu.memory_space<vmem>>, %arg5: memref<9x8x8xf32, #tpu.memory_space<vmem>>, %arg6: memref<8x1xf32, #tpu.memory_space<vmem>>, %arg7: memref<8x4xf32, #tpu.memory_space<vmem>>, %arg8: memref<8x1xf32, #tpu.memory_space<vmem>>, %arg9: memref<1x8x100xf32, #tpu.memory_space<vmem>>, %arg10: memref<8x122xf32, #tpu.memory_space<vmem>>) attributes {dimension_semantics = [#tpu.dimension_semantics<parallel>], iteration_bounds = array<i64: 2>, scalar_prefetch = 0 : i64, scratch_operands = 1 : i64, tpu.core_type = #tpu.core_type<tc>, window_params = [{pipeline_mode = #tpu.pipeline_mode<synchronous>, transform_indices = @transform_0, window_bounds = array<i64: 1, 100>}, {transform_indices = @transform_1, window_bounds = array<i64: 1, 4, 4, 122>}, {pipeline_mode = #tpu.pipeline_mode<synchronous>, transform_indices = @transform_2, window_bounds = array<i64: 9, 8, 4>}, {pipeline_mode = #tpu.pipeline_mode<synchronous>, transform_indices = @transform_3, window_bounds = array<i64: 8, 1>}, {pipeline_mode = #tpu.pipeline_mode<synchronous>, transform_indices = @transform_4, window_bounds = array<i64: 9, 8, 8>}, {pipeline_mode = #tpu.pipeline_mode<synchronous>, transform_indices = @transform_5, window_bounds = array<i64: 8, 1>}, {pipeline_mode = #tpu.pipeline_mode<synchronous>, transform_indices = @transform_6, window_bounds = array<i64: 8, 4>}, {pipeline_mode = #tpu.pipeline_mode<synchronous>, transform_indices = @transform_7, window_bounds = array<i64: 8, 1>}, {transform_indices = @transform_8, window_bounds = array<i64: 1, 8, 100>}]} {
    %c0 = arith.constant 0 : index
    %c0_0 = arith.constant 0 : index
    %0 = vector.load %arg1[%c0, %c0_0] : memref<1x100xf32, #tpu.memory_space<vmem>>, vector<1x100xf32>
    %cst = arith.constant 0.000000e+00 : f32
    %1 = vector.broadcast %cst : f32 to vector<8x100xf32>
    %c0_1 = arith.constant 0 : index
    %c0_2 = arith.constant 0 : index
    %c0_3 = arith.constant 0 : index
    %c0_4 = arith.constant 0 : index
    %2 = vector.load %arg2[%c0_1, %c0_2, %c0_3, %c0_4] : memref<1x4x4x122xf32, #tpu.memory_space<vmem>>, vector<1x1x4x100xf32>
    %3 = vector.shape_cast %2 : vector<1x1x4x100xf32> to vector<4x100xf32>
    %c0_5 = arith.constant 0 : index
    %c0_6 = arith.constant 0 : index
    %c0_7 = arith.constant 0 : index
    %4 = vector.load %arg3[%c0_5, %c0_6, %c0_7] : memref<9x8x4xf32, #tpu.memory_space<vmem>>, vector<1x8x4xf32>
    %5 = vector.shape_cast %4 : vector<1x8x4xf32> to vector<8x4xf32>
    %cst_8 = arith.constant dense<0.000000e+00> : vector<8x100xf32>
    %6 = tpu.matmul %5, %3, %cst_8 {dimension_numbers = #tpu.dot_dimension_numbers<[1], [0], [0], [1], [0, 0, 1, 1], [], []>} : vector<8x4xf32>, vector<4x100xf32>, vector<8x100xf32> -> vector<8x100xf32>
    %7 = arith.addf %1, %6 : vector<8x100xf32>
    %c0_9 = arith.constant 0 : index
    %c1 = arith.constant 1 : index
    %c0_10 = arith.constant 0 : index
    %c0_11 = arith.constant 0 : index
    %8 = vector.load %arg2[%c0_9, %c1, %c0_10, %c0_11] : memref<1x4x4x122xf32, #tpu.memory_space<vmem>>, vector<1x1x4x100xf32>
    %9 = vector.shape_cast %8 : vector<1x1x4x100xf32> to vector<4x100xf32>
    %c1_12 = arith.constant 1 : index
    %c0_13 = arith.constant 0 : index
    %c0_14 = arith.constant 0 : index
    %10 = vector.load %arg3[%c1_12, %c0_13, %c0_14] : memref<9x8x4xf32, #tpu.memory_space<vmem>>, vector<1x8x4xf32>
    %11 = vector.shape_cast %10 : vector<1x8x4xf32> to vector<8x4xf32>
    %cst_15 = arith.constant dense<0.000000e+00> : vector<8x100xf32>
    %12 = tpu.matmul %11, %9, %cst_15 {dimension_numbers = #tpu.dot_dimension_numbers<[1], [0], [0], [1], [0, 0, 1, 1], [], []>} : vector<8x4xf32>, vector<4x100xf32>, vector<8x100xf32> -> vector<8x100xf32>
    %13 = arith.addf %7, %12 : vector<8x100xf32>
    %c0_16 = arith.constant 0 : index
    %c0_17 = arith.constant 0 : index
    %c0_18 = arith.constant 0 : index
    %c1_19 = arith.constant 1 : index
    %14 = vector.load %arg2[%c0_16, %c0_17, %c0_18, %c1_19] : memref<1x4x4x122xf32, #tpu.memory_space<vmem>>, vector<1x1x4x100xf32>
    %15 = vector.shape_cast %14 : vector<1x1x4x100xf32> to vector<4x100xf32>
    %c2 = arith.constant 2 : index
    %c0_20 = arith.constant 0 : index
    %c0_21 = arith.constant 0 : index
    %16 = vector.load %arg3[%c2, %c0_20, %c0_21] : memref<9x8x4xf32, #tpu.memory_space<vmem>>, vector<1x8x4xf32>
    %17 = vector.shape_cast %16 : vector<1x8x4xf32> to vector<8x4xf32>
    %cst_22 = arith.constant dense<0.000000e+00> : vector<8x100xf32>
    %18 = tpu.matmul %17, %15, %cst_22 {dimension_numbers = #tpu.dot_dimension_numbers<[1], [0], [0], [1], [0, 0, 1, 1], [], []>} : vector<8x4xf32>, vector<4x100xf32>, vector<8x100xf32> -> vector<8x100xf32>
    %19 = arith.addf %13, %18 : vector<8x100xf32>
    %c0_23 = arith.constant 0 : index
    %c2_24 = arith.constant 2 : index
    %c0_25 = arith.constant 0 : index
    %c0_26 = arith.constant 0 : index
    %20 = vector.load %arg2[%c0_23, %c2_24, %c0_25, %c0_26] : memref<1x4x4x122xf32, #tpu.memory_space<vmem>>, vector<1x1x4x100xf32>
    %21 = vector.shape_cast %20 : vector<1x1x4x100xf32> to vector<4x100xf32>
    %c3 = arith.constant 3 : index
    %c0_27 = arith.constant 0 : index
    %c0_28 = arith.constant 0 : index
    %22 = vector.load %arg3[%c3, %c0_27, %c0_28] : memref<9x8x4xf32, #tpu.memory_space<vmem>>, vector<1x8x4xf32>
    %23 = vector.shape_cast %22 : vector<1x8x4xf32> to vector<8x4xf32>
    %cst_29 = arith.constant dense<0.000000e+00> : vector<8x100xf32>
    %24 = tpu.matmul %23, %21, %cst_29 {dimension_numbers = #tpu.dot_dimension_numbers<[1], [0], [0], [1], [0, 0, 1, 1], [], []>} : vector<8x4xf32>, vector<4x100xf32>, vector<8x100xf32> -> vector<8x100xf32>
    %25 = arith.addf %19, %24 : vector<8x100xf32>
    %c0_30 = arith.constant 0 : index
    %c3_31 = arith.constant 3 : index
    %c0_32 = arith.constant 0 : index
    %c0_33 = arith.constant 0 : index
    %26 = vector.load %arg2[%c0_30, %c3_31, %c0_32, %c0_33] : memref<1x4x4x122xf32, #tpu.memory_space<vmem>>, vector<1x1x4x100xf32>
    %27 = vector.shape_cast %26 : vector<1x1x4x100xf32> to vector<4x100xf32>
    %c4 = arith.constant 4 : index
    %c0_34 = arith.constant 0 : index
    %c0_35 = arith.constant 0 : index
    %28 = vector.load %arg3[%c4, %c0_34, %c0_35] : memref<9x8x4xf32, #tpu.memory_space<vmem>>, vector<1x8x4xf32>
    %29 = vector.shape_cast %28 : vector<1x8x4xf32> to vector<8x4xf32>
    %cst_36 = arith.constant dense<0.000000e+00> : vector<8x100xf32>
    %30 = tpu.matmul %29, %27, %cst_36 {dimension_numbers = #tpu.dot_dimension_numbers<[1], [0], [0], [1], [0, 0, 1, 1], [], []>} : vector<8x4xf32>, vector<4x100xf32>, vector<8x100xf32> -> vector<8x100xf32>
    %31 = arith.addf %25, %30 : vector<8x100xf32>
    %c0_37 = arith.constant 0 : index
    %c2_38 = arith.constant 2 : index
    %c0_39 = arith.constant 0 : index
    %c1_40 = arith.constant 1 : index
    %32 = vector.load %arg2[%c0_37, %c2_38, %c0_39, %c1_40] : memref<1x4x4x122xf32, #tpu.memory_space<vmem>>, vector<1x1x4x100xf32>
    %33 = vector.shape_cast %32 : vector<1x1x4x100xf32> to vector<4x100xf32>
    %c5 = arith.constant 5 : index
    %c0_41 = arith.constant 0 : index
    %c0_42 = arith.constant 0 : index
    %34 = vector.load %arg3[%c5, %c0_41, %c0_42] : memref<9x8x4xf32, #tpu.memory_space<vmem>>, vector<1x8x4xf32>
    %35 = vector.shape_cast %34 : vector<1x8x4xf32> to vector<8x4xf32>
    %cst_43 = arith.constant dense<0.000000e+00> : vector<8x100xf32>
    %36 = tpu.matmul %35, %33, %cst_43 {dimension_numbers = #tpu.dot_dimension_numbers<[1], [0], [0], [1], [0, 0, 1, 1], [], []>} : vector<8x4xf32>, vector<4x100xf32>, vector<8x100xf32> -> vector<8x100xf32>
    %37 = arith.addf %31, %36 : vector<8x100xf32>
    %c0_44 = arith.constant 0 : index
    %c0_45 = arith.constant 0 : index
    %c0_46 = arith.constant 0 : index
    %c10 = arith.constant 10 : index
    %38 = vector.load %arg2[%c0_44, %c0_45, %c0_46, %c10] : memref<1x4x4x122xf32, #tpu.memory_space<vmem>>, vector<1x1x4x100xf32>
    %39 = vector.shape_cast %38 : vector<1x1x4x100xf32> to vector<4x100xf32>
    %c6 = arith.constant 6 : index
    %c0_47 = arith.constant 0 : index
    %c0_48 = arith.constant 0 : index
    %40 = vector.load %arg3[%c6, %c0_47, %c0_48] : memref<9x8x4xf32, #tpu.memory_space<vmem>>, vector<1x8x4xf32>
    %41 = vector.shape_cast %40 : vector<1x8x4xf32> to vector<8x4xf32>
    %cst_49 = arith.constant dense<0.000000e+00> : vector<8x100xf32>
    %42 = tpu.matmul %41, %39, %cst_49 {dimension_numbers = #tpu.dot_dimension_numbers<[1], [0], [0], [1], [0, 0, 1, 1], [], []>} : vector<8x4xf32>, vector<4x100xf32>, vector<8x100xf32> -> vector<8x100xf32>
    %43 = arith.addf %37, %42 : vector<8x100xf32>
    %c0_50 = arith.constant 0 : index
    %c1_51 = arith.constant 1 : index
    %c0_52 = arith.constant 0 : index
    %c10_53 = arith.constant 10 : index
    %44 = vector.load %arg2[%c0_50, %c1_51, %c0_52, %c10_53] : memref<1x4x4x122xf32, #tpu.memory_space<vmem>>, vector<1x1x4x100xf32>
    %45 = vector.shape_cast %44 : vector<1x1x4x100xf32> to vector<4x100xf32>
    %c7 = arith.constant 7 : index
    %c0_54 = arith.constant 0 : index
    %c0_55 = arith.constant 0 : index
    %46 = vector.load %arg3[%c7, %c0_54, %c0_55] : memref<9x8x4xf32, #tpu.memory_space<vmem>>, vector<1x8x4xf32>
    %47 = vector.shape_cast %46 : vector<1x8x4xf32> to vector<8x4xf32>
    %cst_56 = arith.constant dense<0.000000e+00> : vector<8x100xf32>
    %48 = tpu.matmul %47, %45, %cst_56 {dimension_numbers = #tpu.dot_dimension_numbers<[1], [0], [0], [1], [0, 0, 1, 1], [], []>} : vector<8x4xf32>, vector<4x100xf32>, vector<8x100xf32> -> vector<8x100xf32>
    %49 = arith.addf %43, %48 : vector<8x100xf32>
    %c0_57 = arith.constant 0 : index
    %c0_58 = arith.constant 0 : index
    %c0_59 = arith.constant 0 : index
    %c11 = arith.constant 11 : index
    %50 = vector.load %arg2[%c0_57, %c0_58, %c0_59, %c11] : memref<1x4x4x122xf32, #tpu.memory_space<vmem>>, vector<1x1x4x100xf32>
    %51 = vector.shape_cast %50 : vector<1x1x4x100xf32> to vector<4x100xf32>
    %c8 = arith.constant 8 : index
    %c0_60 = arith.constant 0 : index
    %c0_61 = arith.constant 0 : index
    %52 = vector.load %arg3[%c8, %c0_60, %c0_61] : memref<9x8x4xf32, #tpu.memory_space<vmem>>, vector<1x8x4xf32>
    %53 = vector.shape_cast %52 : vector<1x8x4xf32> to vector<8x4xf32>
    %cst_62 = arith.constant dense<0.000000e+00> : vector<8x100xf32>
    %54 = tpu.matmul %53, %51, %cst_62 {dimension_numbers = #tpu.dot_dimension_numbers<[1], [0], [0], [1], [0, 0, 1, 1], [], []>} : vector<8x4xf32>, vector<4x100xf32>, vector<8x100xf32> -> vector<8x100xf32>
    %55 = arith.addf %49, %54 : vector<8x100xf32>
    %c0_63 = arith.constant 0 : index
    %c0_64 = arith.constant 0 : index
    %56 = vector.load %arg4[%c0_63, %c0_64] : memref<8x1xf32, #tpu.memory_space<vmem>>, vector<8x1xf32>
    %57 = vector.broadcast %56 : vector<8x1xf32> to vector<8x100xf32>
    %58 = arith.addf %55, %57 : vector<8x100xf32>
    %cst_65 = arith.constant 0.000000e+00 : f32
    %59 = vector.broadcast %cst_65 : f32 to vector<8x100xf32>
    %60 = arith.maximumf %58, %59 : vector<8x100xf32>
    %61 = vector.broadcast %0 : vector<1x100xf32> to vector<8x100xf32>
    %62 = arith.mulf %60, %61 : vector<8x100xf32>
    %cst_66 = arith.constant 0.000000e+00 : f32
    %63 = vector.broadcast %cst_66 : f32 to vector<8x122xf32>
    %c0_67 = arith.constant 0 : index
    %c0_68 = arith.constant 0 : index
    %64 = vector.load %arg10[%c0_67, %c0_68] : memref<8x122xf32, #tpu.memory_space<vmem>>, vector<8x122xf32>
    tpu.vector_store %arg10[%c0_67, %c0_68], %63 {strides = array<i32>} : memref<8x122xf32, #tpu.memory_space<vmem>>, vector<8x122xf32>,
    %c0_69 = arith.constant 0 : index
    %c11_70 = arith.constant 11 : index
    %65 = vector.load %arg10[%c0_69, %c11_70] : memref<8x122xf32, #tpu.memory_space<vmem>>, vector<8x100xf32>
    tpu.vector_store %arg10[%c0_69, %c11_70], %62 {strides = array<i32>} : memref<8x122xf32, #tpu.memory_space<vmem>>, vector<8x100xf32>,
    %cst_71 = arith.constant 0.000000e+00 : f32
    %66 = vector.broadcast %cst_71 : f32 to vector<8x100xf32>
    %c0_72 = arith.constant 0 : index
    %c0_73 = arith.constant 0 : index
    %c0_74 = arith.constant 0 : index
    %67 = vector.load %arg5[%c0_72, %c0_73, %c0_74] : memref<9x8x8xf32, #tpu.memory_space<vmem>>, vector<1x8x8xf32>
    %68 = vector.shape_cast %67 : vector<1x8x8xf32> to vector<8x8xf32>
    %c0_75 = arith.constant 0 : index
    %c0_76 = arith.constant 0 : index
    %69 = vector.load %arg10[%c0_75, %c0_76] : memref<8x122xf32, #tpu.memory_space<vmem>>, vector<8x100xf32>
    %cst_77 = arith.constant dense<0.000000e+00> : vector<8x100xf32>
    %70 = tpu.matmul %68, %69, %cst_77 {dimension_numbers = #tpu.dot_dimension_numbers<[1], [0], [0], [1], [0, 0, 1, 1], [], []>} : vector<8x8xf32>, vector<8x100xf32>, vector<8x100xf32> -> vector<8x100xf32>
    %71 = arith.addf %66, %70 : vector<8x100xf32>
    %c1_78 = arith.constant 1 : index
    %c0_79 = arith.constant 0 : index
    %c0_80 = arith.constant 0 : index
    %72 = vector.load %arg5[%c1_78, %c0_79, %c0_80] : memref<9x8x8xf32, #tpu.memory_space<vmem>>, vector<1x8x8xf32>
    %73 = vector.shape_cast %72 : vector<1x8x8xf32> to vector<8x8xf32>
    %c0_81 = arith.constant 0 : index
    %c1_82 = arith.constant 1 : index
    %74 = vector.load %arg10[%c0_81, %c1_82] : memref<8x122xf32, #tpu.memory_space<vmem>>, vector<8x100xf32>
    %cst_83 = arith.constant dense<0.000000e+00> : vector<8x100xf32>
    %75 = tpu.matmul %73, %74, %cst_83 {dimension_numbers = #tpu.dot_dimension_numbers<[1], [0], [0], [1], [0, 0, 1, 1], [], []>} : vector<8x8xf32>, vector<8x100xf32>, vector<8x100xf32> -> vector<8x100xf32>
    %76 = arith.addf %71, %75 : vector<8x100xf32>
    %c2_84 = arith.constant 2 : index
    %c0_85 = arith.constant 0 : index
    %c0_86 = arith.constant 0 : index
    %77 = vector.load %arg5[%c2_84, %c0_85, %c0_86] : memref<9x8x8xf32, #tpu.memory_space<vmem>>, vector<1x8x8xf32>
    %78 = vector.shape_cast %77 : vector<1x8x8xf32> to vector<8x8xf32>
    %c0_87 = arith.constant 0 : index
    %c2_88 = arith.constant 2 : index
    %79 = vector.load %arg10[%c0_87, %c2_88] : memref<8x122xf32, #tpu.memory_space<vmem>>, vector<8x100xf32>
    %cst_89 = arith.constant dense<0.000000e+00> : vector<8x100xf32>
    %80 = tpu.matmul %78, %79, %cst_89 {dimension_numbers = #tpu.dot_dimension_numbers<[1], [0], [0], [1], [0, 0, 1, 1], [], []>} : vector<8x8xf32>, vector<8x100xf32>, vector<8x100xf32> -> vector<8x100xf32>
    %81 = arith.addf %76, %80 : vector<8x100xf32>
    %c3_90 = arith.constant 3 : index
    %c0_91 = arith.constant 0 : index
    %c0_92 = arith.constant 0 : index
    %82 = vector.load %arg5[%c3_90, %c0_91, %c0_92] : memref<9x8x8xf32, #tpu.memory_space<vmem>>, vector<1x8x8xf32>
    %83 = vector.shape_cast %82 : vector<1x8x8xf32> to vector<8x8xf32>
    %c0_93 = arith.constant 0 : index
    %c10_94 = arith.constant 10 : index
    %84 = vector.load %arg10[%c0_93, %c10_94] : memref<8x122xf32, #tpu.memory_space<vmem>>, vector<8x100xf32>
    %cst_95 = arith.constant dense<0.000000e+00> : vector<8x100xf32>
    %85 = tpu.matmul %83, %84, %cst_95 {dimension_numbers = #tpu.dot_dimension_numbers<[1], [0], [0], [1], [0, 0, 1, 1], [], []>} : vector<8x8xf32>, vector<8x100xf32>, vector<8x100xf32> -> vector<8x100xf32>
    %86 = arith.addf %81, %85 : vector<8x100xf32>
    %c4_96 = arith.constant 4 : index
    %c0_97 = arith.constant 0 : index
    %c0_98 = arith.constant 0 : index
    %87 = vector.load %arg5[%c4_96, %c0_97, %c0_98] : memref<9x8x8xf32, #tpu.memory_space<vmem>>, vector<1x8x8xf32>
    %88 = vector.shape_cast %87 : vector<1x8x8xf32> to vector<8x8xf32>
    %c0_99 = arith.constant 0 : index
    %c11_100 = arith.constant 11 : index
    %89 = vector.load %arg10[%c0_99, %c11_100] : memref<8x122xf32, #tpu.memory_space<vmem>>, vector<8x100xf32>
    %cst_101 = arith.constant dense<0.000000e+00> : vector<8x100xf32>
    %90 = tpu.matmul %88, %89, %cst_101 {dimension_numbers = #tpu.dot_dimension_numbers<[1], [0], [0], [1], [0, 0, 1, 1], [], []>} : vector<8x8xf32>, vector<8x100xf32>, vector<8x100xf32> -> vector<8x100xf32>
    %91 = arith.addf %86, %90 : vector<8x100xf32>
    %c5_102 = arith.constant 5 : index
    %c0_103 = arith.constant 0 : index
    %c0_104 = arith.constant 0 : index
    %92 = vector.load %arg5[%c5_102, %c0_103, %c0_104] : memref<9x8x8xf32, #tpu.memory_space<vmem>>, vector<1x8x8xf32>
    %93 = vector.shape_cast %92 : vector<1x8x8xf32> to vector<8x8xf32>
    %c0_105 = arith.constant 0 : index
    %c12 = arith.constant 12 : index
    %94 = vector.load %arg10[%c0_105, %c12] : memref<8x122xf32, #tpu.memory_space<vmem>>, vector<8x100xf32>
    %cst_106 = arith.constant dense<0.000000e+00> : vector<8x100xf32>
    %95 = tpu.matmul %93, %94, %cst_106 {dimension_numbers = #tpu.dot_dimension_numbers<[1], [0], [0], [1], [0, 0, 1, 1], [], []>} : vector<8x8xf32>, vector<8x100xf32>, vector<8x100xf32> -> vector<8x100xf32>
    %96 = arith.addf %91, %95 : vector<8x100xf32>
    %c6_107 = arith.constant 6 : index
    %c0_108 = arith.constant 0 : index
    %c0_109 = arith.constant 0 : index
    %97 = vector.load %arg5[%c6_107, %c0_108, %c0_109] : memref<9x8x8xf32, #tpu.memory_space<vmem>>, vector<1x8x8xf32>
    %98 = vector.shape_cast %97 : vector<1x8x8xf32> to vector<8x8xf32>
    %c0_110 = arith.constant 0 : index
    %c20 = arith.constant 20 : index
    %99 = vector.load %arg10[%c0_110, %c20] : memref<8x122xf32, #tpu.memory_space<vmem>>, vector<8x100xf32>
    %cst_111 = arith.constant dense<0.000000e+00> : vector<8x100xf32>
    %100 = tpu.matmul %98, %99, %cst_111 {dimension_numbers = #tpu.dot_dimension_numbers<[1], [0], [0], [1], [0, 0, 1, 1], [], []>} : vector<8x8xf32>, vector<8x100xf32>, vector<8x100xf32> -> vector<8x100xf32>
    %101 = arith.addf %96, %100 : vector<8x100xf32>
    %c7_112 = arith.constant 7 : index
    %c0_113 = arith.constant 0 : index
    %c0_114 = arith.constant 0 : index
    %102 = vector.load %arg5[%c7_112, %c0_113, %c0_114] : memref<9x8x8xf32, #tpu.memory_space<vmem>>, vector<1x8x8xf32>
    %103 = vector.shape_cast %102 : vector<1x8x8xf32> to vector<8x8xf32>
    %c0_115 = arith.constant 0 : index
    %c21 = arith.constant 21 : index
    %104 = vector.load %arg10[%c0_115, %c21] : memref<8x122xf32, #tpu.memory_space<vmem>>, vector<8x100xf32>
    %cst_116 = arith.constant dense<0.000000e+00> : vector<8x100xf32>
    %105 = tpu.matmul %103, %104, %cst_116 {dimension_numbers = #tpu.dot_dimension_numbers<[1], [0], [0], [1], [0, 0, 1, 1], [], []>} : vector<8x8xf32>, vector<8x100xf32>, vector<8x100xf32> -> vector<8x100xf32>
    %106 = arith.addf %101, %105 : vector<8x100xf32>
    %c8_117 = arith.constant 8 : index
    %c0_118 = arith.constant 0 : index
    %c0_119 = arith.constant 0 : index
    %107 = vector.load %arg5[%c8_117, %c0_118, %c0_119] : memref<9x8x8xf32, #tpu.memory_space<vmem>>, vector<1x8x8xf32>
    %108 = vector.shape_cast %107 : vector<1x8x8xf32> to vector<8x8xf32>
    %c0_120 = arith.constant 0 : index
    %c22 = arith.constant 22 : index
    %109 = vector.load %arg10[%c0_120, %c22] : memref<8x122xf32, #tpu.memory_space<vmem>>, vector<8x100xf32>
    %cst_121 = arith.constant dense<0.000000e+00> : vector<8x100xf32>
    %110 = tpu.matmul %108, %109, %cst_121 {dimension_numbers = #tpu.dot_dimension_numbers<[1], [0], [0], [1], [0, 0, 1, 1], [], []>} : vector<8x8xf32>, vector<8x100xf32>, vector<8x100xf32> -> vector<8x100xf32>
    %111 = arith.addf %106, %110 : vector<8x100xf32>
    %c0_122 = arith.constant 0 : index
    %c0_123 = arith.constant 0 : index
    %112 = vector.load %arg6[%c0_122, %c0_123] : memref<8x1xf32, #tpu.memory_space<vmem>>, vector<8x1xf32>
    %113 = vector.broadcast %112 : vector<8x1xf32> to vector<8x100xf32>
    %114 = arith.addf %111, %113 : vector<8x100xf32>
    %c0_124 = arith.constant 0 : index
    %c3_125 = arith.constant 3 : index
    %c0_126 = arith.constant 0 : index
    %c0_127 = arith.constant 0 : index
    %115 = vector.load %arg2[%c0_124, %c3_125, %c0_126, %c0_127] : memref<1x4x4x122xf32, #tpu.memory_space<vmem>>, vector<1x1x4x100xf32>
    %116 = vector.shape_cast %115 : vector<1x1x4x100xf32> to vector<4x100xf32>
    %c0_128 = arith.constant 0 : index
    %c0_129 = arith.constant 0 : index
    %117 = vector.load %arg7[%c0_128, %c0_129] : memref<8x4xf32, #tpu.memory_space<vmem>>, vector<8x4xf32>
    %cst_130 = arith.constant dense<0.000000e+00> : vector<8x100xf32>
    %118 = tpu.matmul %117, %116, %cst_130 {dimension_numbers = #tpu.dot_dimension_numbers<[1], [0], [0], [1], [0, 0, 1, 1], [], []>} : vector<8x4xf32>, vector<4x100xf32>, vector<8x100xf32> -> vector<8x100xf32>
    %c0_131 = arith.constant 0 : index
    %c0_132 = arith.constant 0 : index
    %119 = vector.load %arg8[%c0_131, %c0_132] : memref<8x1xf32, #tpu.memory_space<vmem>>, vector<8x1xf32>
    %120 = vector.broadcast %119 : vector<8x1xf32> to vector<8x100xf32>
    %121 = arith.addf %118, %120 : vector<8x100xf32>
    %122 = arith.addf %114, %121 : vector<8x100xf32>
    %cst_133 = arith.constant 0.000000e+00 : f32
    %123 = vector.broadcast %cst_133 : f32 to vector<8x100xf32>
    %124 = arith.maximumf %122, %123 : vector<8x100xf32>
    %c0_134 = arith.constant 0 : index
    %c0_135 = arith.constant 0 : index
    %c0_136 = arith.constant 0 : index
    %125 = vector.load %arg9[%c0_134, %c0_135, %c0_136] : memref<1x8x100xf32, #tpu.memory_space<vmem>>, vector<1x8x100xf32>
    %126 = vector.shape_cast %125 : vector<1x8x100xf32> to vector<8x100xf32>
    %127 = vector.shape_cast %124 : vector<8x100xf32> to vector<1x8x100xf32>
    tpu.vector_store %arg9[%c0_134, %c0_135, %c0_136], %127 {strides = array<i32>} : memref<1x8x100xf32, #tpu.memory_space<vmem>>, vector<1x8x100xf32>,
    return
  }
  func.func @transform_0(%arg0: i32) -> (i32, i32) {
    %c0_i32 = arith.constant 0 : i32
    %c0_i32_0 = arith.constant 0 : i32
    %c0_i32_1 = arith.constant 0 : i32
    return %c0_i32, %c0_i32_0 : i32, i32
  }
  func.func @transform_1(%arg0: i32) -> (i32, i32, i32, i32) {
    %c0_i32 = arith.constant 0 : i32
    %c0_i32_0 = arith.constant 0 : i32
    %c0_i32_1 = arith.constant 0 : i32
    %c0_i32_2 = arith.constant 0 : i32
    return %arg0, %c0_i32, %c0_i32_0, %c0_i32_1 : i32, i32, i32, i32
  }
  func.func @transform_2(%arg0: i32) -> (i32, i32, i32) {
    %c0_i32 = arith.constant 0 : i32
    %c0_i32_0 = arith.constant 0 : i32
    %c0_i32_1 = arith.constant 0 : i32
    %c0_i32_2 = arith.constant 0 : i32
    return %c0_i32, %c0_i32_0, %c0_i32_1 : i32, i32, i32
  }
  func.func @transform_3(%arg0: i32) -> (i32, i32) {
    %c0_i32 = arith.constant 0 : i32
    %c0_i32_0 = arith.constant 0 : i32
    %c0_i32_1 = arith.constant 0 : i32
    return %c0_i32, %c0_i32_0 : i32, i32
  }
  func.func @transform_4(%arg0: i32) -> (i32, i32, i32) {
    %c0_i32 = arith.constant 0 : i32
    %c0_i32_0 = arith.constant 0 : i32
    %c0_i32_1 = arith.constant 0 : i32
    %c0_i32_2 = arith.constant 0 : i32
    return %c0_i32, %c0_i32_0, %c0_i32_1 : i32, i32, i32
  }
  func.func @transform_5(%arg0: i32) -> (i32, i32) {
    %c0_i32 = arith.constant 0 : i32
    %c0_i32_0 = arith.constant 0 : i32
    %c0_i32_1 = arith.constant 0 : i32
    return %c0_i32, %c0_i32_0 : i32, i32
  }
  func.func @transform_6(%arg0: i32) -> (i32, i32) {
    %c0_i32 = arith.constant 0 : i32
    %c0_i32_0 = arith.constant 0 : i32
    %c0_i32_1 = arith.constant 0 : i32
    return %c0_i32, %c0_i32_0 : i32, i32
  }
  func.func @transform_7(%arg0: i32) -> (i32, i32) {
    %c0_i32 = arith.constant 0 : i32
    %c0_i32_0 = arith.constant 0 : i32
    %c0_i32_1 = arith.constant 0 : i32
    return %c0_i32, %c0_i32_0 : i32, i32
  }
  func.func @transform_8(%arg0: i32) -> (i32, i32, i32) {
    %c0_i32 = arith.constant 0 : i32
    %c0_i32_0 = arith.constant 0 : i32
    %c0_i32_1 = arith.constant 0 : i32
    return %arg0, %c0_i32, %c0_i32_0 : i32, i32, i32
  }
}

</mosaic_0001>

<llo_original>
// kernel: tpu_custom_call.1
$region0: #{tpu_custom_call.1}
  #allocation0 [shape = 'u32[]', space=smem, size = 0x4, offset = 0x4, fixed_abs, tag = 'smem constant byte address 0x4 - core index']
  #allocation1 [shape = 'u32[144,128]{1,0:T(1,128)}', space=vmem, size = 0x12000, scoped, tag = 'internal scratch']
  #allocation2 [shape = 'f32[8,122]{1,0:T(8,128)}', space=vmem, size = 0x1000, scoped, tag = 'scratch operand']
  %s0 = inlined_call_operand.vmem [shape: f32[1,100], index: 0, kind: input, shape index: {}]
  %s1 = inlined_call_operand.vmem [shape: f32[2,4,4,122], index: 1, kind: input, shape index: {}]
  %s2 = inlined_call_operand.vmem [shape: f32[9,8,4], index: 2, kind: input, shape index: {}]
  %s3 = inlined_call_operand.vmem [shape: f32[8,1], index: 3, kind: input, shape index: {}]
  %s4 = inlined_call_operand.vmem [shape: f32[9,8,8], index: 4, kind: input, shape index: {}]
  %s5 = inlined_call_operand.vmem [shape: f32[8,1], index: 5, kind: input, shape index: {}]
  %s6 = inlined_call_operand.vmem [shape: f32[8,4], index: 6, kind: input, shape index: {}]
  %s7 = inlined_call_operand.vmem [shape: f32[8,1], index: 7, kind: input, shape index: {}]
  %s8 = inlined_call_operand.hbm [shape: f32[2,8,100], index: 8, kind: output, shape index: {}]
  %s9 = sld [smem:[#allocation0]]
  $region65: #{tpu_custom_call.1} parent=0
    _
  %s11 = ssub.s32 1, %s9
  %s12 = scalar_select 0, %s11, %s9
  $region1: #{tpu_custom_call.1} parent=0
    #allocation3 [shape = 'u8[8192]{0}', space=vmem, size = 0x2000, scoped, tag = 'output window, operand 0']
    #allocation4 [shape = 's32[2]{0}', space=sflag, size = 0x8, scoped, tag = 'scoped memory for tpu_custom_call.1']
    %13 = vsyncpa [#allocation4], 0
    %s14 = scalar_lea.sflag [#allocation4], 1
    %15 = vsyncpa %s14, 0
    loop: start=0, step=1, limit=4
    $region2: #{tpu_custom_call.1} parent=1 // loop_pre_header
      _
    $region3: #{tpu_custom_call.1} parent=1 // loop_header
      %s17 = sphi 0, %s21
      %p18 = scmp.ge.s32.totalorder %s17, 4
      %s25 = sphi 0, %s25
      %s27 = sphi 0, %s25
      %s28 = sphi 0, %s27
      %s42 = sphi 0, %s28
      %s48 = sphi 0, %s50
      %s51 = sphi 0, %s48
      %s52 = sphi 0, %s51
      %s68 = sphi 0, %s52
      %s72 = sphi 0, %s72
      %s74 = sphi 0, %s72
      %s75 = sphi 0, %s74
      %s89 = sphi 0, %s75
      %s93 = sphi 0, %s93
      %s95 = sphi 0, %s93
      %s96 = sphi 0, %s95
      %s110 = sphi 0, %s96
      %s114 = sphi 0, %s114
      %s116 = sphi 0, %s114
      %s117 = sphi 0, %s116
      %s131 = sphi 0, %s117
      %s135 = sphi 0, %s135
      %s137 = sphi 0, %s135
      %s138 = sphi 0, %s137
      %s152 = sphi 0, %s138
      %s156 = sphi 0, %s156
      %s158 = sphi 0, %s156
      %s159 = sphi 0, %s158
      %s173 = sphi 0, %s159
      %s177 = sphi 0, %s177
      %s179 = sphi 0, %s177
      %s180 = sphi 0, %s179
      %s194 = sphi 0, %s180
      %s200 = sphi 0, %s202
      %s203 = sphi 0, %s200
      %s204 = sphi 0, %s203
      %s220 = sphi 0, %s204
    $region4: #{tpu_custom_call.1} parent=1 // loop_header_branch
      %20 = sbr.rel (%p18) target = $region8
    $region5: #{tpu_custom_call.1} parent=1 // loop_body
      %s22 = ssub.s32 %s17, 1
      %s23 = ssub.s32 %s17, 2
      %s24 = sadd.s32 %s17, 1
      %s26 = sadd.s32 %s25, 1
      %p29 = scmp.eq.s32.totalorder %s17, 1
      %p30 = scmp.ne.s32.totalorder %s25, %s27
      %p31 = scmp.eq.s32.totalorder %s17, 0
      %p32 = por %p30, %p31
      %p33 = scmp.ne.s32.totalorder %s25, %s27
      %p34 = scmp.eq.s32.totalorder %s22, 1
      %p35 = por %p33, %p34
      %p36 = scmp.ne.s32.totalorder %s27, %s28
      %p37 = scmp.eq.s32.totalorder %s22, 0
      %p38 = por %p36, %p37
      %p39 = scmp.ne.s32.totalorder %s27, %s28
      %p40 = scmp.eq.s32.totalorder %s23, 1
      %p41 = por %p39, %p40
      %p43 = scmp.ne.s32.totalorder %s28, %s42
      %p44 = scmp.eq.s32.totalorder %s23, 0
      %p45 = por %p43, %p44
      %s46 = ssub.s32 %s17, %s24
      %p47 = scmp.eq.s32.totalorder %s46, 0
      %s49 = sadd.s32 %s48, 1
      %s50 = scalar_select %p47, %s48, %s49
      %p53 = pneg %p47
      %p54 = scmp.eq.s32.totalorder %s17, 1
      %p55 = por %p53, %p54
      %p56 = scmp.ne.s32.totalorder %s48, %s51
      %p57 = scmp.eq.s32.totalorder %s17, 0
      %p58 = por %p56, %p57
      %p59 = scmp.ne.s32.totalorder %s48, %s51
      %p60 = scmp.eq.s32.totalorder %s22, 1
      %p61 = por %p59, %p60
      %p62 = scmp.ne.s32.totalorder %s51, %s52
      %p63 = scmp.eq.s32.totalorder %s22, 0
      %p64 = por %p62, %p63
      %p65 = scmp.ne.s32.totalorder %s51, %s52
      %p66 = scmp.eq.s32.totalorder %s23, 1
      %p67 = por %p65, %p66
      %p69 = scmp.ne.s32.totalorder %s52, %s68
      %p70 = scmp.eq.s32.totalorder %s23, 0
      %p71 = por %p69, %p70
      %s73 = sadd.s32 %s72, 1
      %p76 = scmp.eq.s32.totalorder %s17, 1
      %p77 = scmp.ne.s32.totalorder %s72, %s74
      %p78 = scmp.eq.s32.totalorder %s17, 0
      %p79 = por %p77, %p78
      %p80 = scmp.ne.s32.totalorder %s72, %s74
      %p81 = scmp.eq.s32.totalorder %s22, 1
      %p82 = por %p80, %p81
      %p83 = scmp.ne.s32.totalorder %s74, %s75
      %p84 = scmp.eq.s32.totalorder %s22, 0
      %p85 = por %p83, %p84
      %p86 = scmp.ne.s32.totalorder %s74, %s75
      %p87 = scmp.eq.s32.totalorder %s23, 1
      %p88 = por %p86, %p87
      %p90 = scmp.ne.s32.totalorder %s75, %s89
      %p91 = scmp.eq.s32.totalorder %s23, 0
      %p92 = por %p90, %p91
      %s94 = sadd.s32 %s93, 1
      %p97 = scmp.eq.s32.totalorder %s17, 1
      %p98 = scmp.ne.s32.totalorder %s93, %s95
      %p99 = scmp.eq.s32.totalorder %s17, 0
      %p100 = por %p98, %p99
      %p101 = scmp.ne.s32.totalorder %s93, %s95
      %p102 = scmp.eq.s32.totalorder %s22, 1
      %p103 = por %p101, %p102
      %p104 = scmp.ne.s32.totalorder %s95, %s96
      %p105 = scmp.eq.s32.totalorder %s22, 0
      %p106 = por %p104, %p105
      %p107 = scmp.ne.s32.totalorder %s95, %s96
      %p108 = scmp.eq.s32.totalorder %s23, 1
      %p109 = por %p107, %p108
      %p111 = scmp.ne.s32.totalorder %s96, %s110
      %p112 = scmp.eq.s32.totalorder %s23, 0
      %p113 = por %p111, %p112
      %s115 = sadd.s32 %s114, 1
      %p118 = scmp.eq.s32.totalorder %s17, 1
      %p119 = scmp.ne.s32.totalorder %s114, %s116
      %p120 = scmp.eq.s32.totalorder %s17, 0
      %p121 = por %p119, %p120
      %p122 = scmp.ne.s32.totalorder %s114, %s116
      %p123 = scmp.eq.s32.totalorder %s22, 1
      %p124 = por %p122, %p123
      %p125 = scmp.ne.s32.totalorder %s116, %s117
      %p126 = scmp.eq.s32.totalorder %s22, 0
      %p127 = por %p125, %p126
      %p128 = scmp.ne.s32.totalorder %s116, %s117
      %p129 = scmp.eq.s32.totalorder %s23, 1
      %p130 = por %p128, %p129
      %p132 = scmp.ne.s32.totalorder %s117, %s131
      %p133 = scmp.eq.s32.totalorder %s23, 0
      %p134 = por %p132, %p133
      %s136 = sadd.s32 %s135, 1
      %p139 = scmp.eq.s32.totalorder %s17, 1
      %p140 = scmp.ne.s32.totalorder %s135, %s137
      %p141 = scmp.eq.s32.totalorder %s17, 0
      %p142 = por %p140, %p141
      %p143 = scmp.ne.s32.totalorder %s135, %s137
      %p144 = scmp.eq.s32.totalorder %s22, 1
      %p145 = por %p143, %p144
      %p146 = scmp.ne.s32.totalorder %s137, %s138
      %p147 = scmp.eq.s32.totalorder %s22, 0
      %p148 = por %p146, %p147
      %p149 = scmp.ne.s32.totalorder %s137, %s138
      %p150 = scmp.eq.s32.totalorder %s23, 1
      %p151 = por %p149, %p150
      %p153 = scmp.ne.s32.totalorder %s138, %s152
      %p154 = scmp.eq.s32.totalorder %s23, 0
      %p155 = por %p153, %p154
      %s157 = sadd.s32 %s156, 1
      %p160 = scmp.eq.s32.totalorder %s17, 1
      %p161 = scmp.ne.s32.totalorder %s156, %s158
      %p162 = scmp.eq.s32.totalorder %s17, 0
      %p163 = por %p161, %p162
      %p164 = scmp.ne.s32.totalorder %s156, %s158
      %p165 = scmp.eq.s32.totalorder %s22, 1
      %p166 = por %p164, %p165
      %p167 = scmp.ne.s32.totalorder %s158, %s159
      %p168 = scmp.eq.s32.totalorder %s22, 0
      %p169 = por %p167, %p168
      %p170 = scmp.ne.s32.totalorder %s158, %s159
      %p171 = scmp.eq.s32.totalorder %s23, 1
      %p172 = por %p170, %p171
      %p174 = scmp.ne.s32.totalorder %s159, %s173
      %p175 = scmp.eq.s32.totalorder %s23, 0
      %p176 = por %p174, %p175
      %s178 = sadd.s32 %s177, 1
      %p181 = scmp.eq.s32.totalorder %s17, 1
      %p182 = scmp.ne.s32.totalorder %s177, %s179
      %p183 = scmp.eq.s32.totalorder %s17, 0
      %p184 = por %p182, %p183
      %p185 = scmp.ne.s32.totalorder %s177, %s179
      %p186 = scmp.eq.s32.totalorder %s22, 1
      %p187 = por %p185, %p186
      %p188 = scmp.ne.s32.totalorder %s179, %s180
      %p189 = scmp.eq.s32.totalorder %s22, 0
      %p190 = por %p188, %p189
      %p191 = scmp.ne.s32.totalorder %s179, %s180
      %p192 = scmp.eq.s32.totalorder %s23, 1
      %p193 = por %p191, %p192
      %p195 = scmp.ne.s32.totalorder %s180, %s194
      %p196 = scmp.eq.s32.totalorder %s23, 0
      %p197 = por %p195, %p196
      %s198 = ssub.s32 %s17, %s24
      %p199 = scmp.eq.s32.totalorder %s198, 0
      %s201 = sadd.s32 %s200, 1
      %s202 = scalar_select %p199, %s200, %s201
      %p205 = pneg %p199
      %p206 = scmp.eq.s32.totalorder %s17, 1
      %p207 = por %p205, %p206
      %p208 = scmp.ne.s32.totalorder %s200, %s203
      %p209 = scmp.eq.s32.totalorder %s17, 0
      %p210 = por %p208, %p209
      %p211 = scmp.ne.s32.totalorder %s200, %s203
      %p212 = scmp.eq.s32.totalorder %s22, 1
      %p213 = por %p211, %p212
      %p214 = scmp.ne.s32.totalorder %s203, %s204
      %p215 = scmp.eq.s32.totalorder %s22, 0
      %p216 = por %p214, %p215
      %p217 = scmp.ne.s32.totalorder %s203, %s204
      %p218 = scmp.eq.s32.totalorder %s23, 1
      %p219 = por %p217, %p218
      %p221 = scmp.ne.s32.totalorder %s204, %s220
      %p222 = scmp.eq.s32.totalorder %s23, 0
      %p223 = por %p221, %p222
      %p224 = scmp.le.s32.totalorder 1, %s17
      %p225 = scmp.lt.s32.totalorder %s17, 3
      %p226 = pnand %p224, %p225
      %p227 = pneg %p226
      // Predicated region
      $region9: #{tpu_custom_call.1} parent=5 // pred_check
        _
      $region10: #{tpu_custom_call.1} parent=5 // pred_check_branch
        %229 = sbr.rel (%p226) target = $region12
      $region11: #{tpu_custom_call.1} parent=5 // pred_region
        %s230 = ssub.s32 %s17, 1
        // Predicated region
        $region13: #{tpu_custom_call.1} parent=11 // pred_check
          %p231 = pneg %p38
        $region14: #{tpu_custom_call.1} parent=11 // pred_check_branch
          %233 = sbr.rel (%p231) target = $region16
        $region15: #{tpu_custom_call.1} parent=11 // pred_region
          _
        $region16: #{tpu_custom_call.1} parent=11 // pred_fallthru
          _
        // Predicated region
        $region17: #{tpu_custom_call.1} parent=11 // pred_check
          %p234 = pneg %p85
        $region18: #{tpu_custom_call.1} parent=11 // pred_check_branch
          %236 = sbr.rel (%p234) target = $region20
        $region19: #{tpu_custom_call.1} parent=11 // pred_region
          _
        $region20: #{tpu_custom_call.1} parent=11 // pred_fallthru
          _
        // Predicated region
        $region21: #{tpu_custom_call.1} parent=11 // pred_check
          %p237 = pneg %p106
        $region22: #{tpu_custom_call.1} parent=11 // pred_check_branch
          %239 = sbr.rel (%p237) target = $region24
        $region23: #{tpu_custom_call.1} parent=11 // pred_region
          _
        $region24: #{tpu_custom_call.1} parent=11 // pred_fallthru
          _
        // Predicated region
        $region25: #{tpu_custom_call.1} parent=11 // pred_check
          %p240 = pneg %p127
        $region26: #{tpu_custom_call.1} parent=11 // pred_check_branch
          %242 = sbr.rel (%p240) target = $region28
        $region27: #{tpu_custom_call.1} parent=11 // pred_region
          _
        $region28: #{tpu_custom_call.1} parent=11 // pred_fallthru
          _
        // Predicated region
        $region29: #{tpu_custom_call.1} parent=11 // pred_check
          %p243 = pneg %p148
        $region30: #{tpu_custom_call.1} parent=11 // pred_check_branch
          %245 = sbr.rel (%p243) target = $region32
        $region31: #{tpu_custom_call.1} parent=11 // pred_region
          _
        $region32: #{tpu_custom_call.1} parent=11 // pred_fallthru
          _
        // Predicated region
        $region33: #{tpu_custom_call.1} parent=11 // pred_check
          %p246 = pneg %p169
        $region34: #{tpu_custom_call.1} parent=11 // pred_check_branch
          %248 = sbr.rel (%p246) target = $region36
        $region35: #{tpu_custom_call.1} parent=11 // pred_region
          _
        $region36: #{tpu_custom_call.1} parent=11 // pred_fallthru
          _
        // Predicated region
        $region37: #{tpu_custom_call.1} parent=11 // pred_check
          %p249 = pneg %p190
        $region38: #{tpu_custom_call.1} parent=11 // pred_check_branch
          %251 = sbr.rel (%p249) target = $region40
        $region39: #{tpu_custom_call.1} parent=11 // pred_region
          _
        $region40: #{tpu_custom_call.1} parent=11 // pred_fallthru
          _
      $region12: #{tpu_custom_call.1} parent=5 // pred_fallthru
        _
      %p252 = scmp.lt.s32.totalorder %s17, 2
      // Predicated region
      $region41: #{tpu_custom_call.1} parent=5 // pred_check
        %p253 = pneg %p252
      $region42: #{tpu_custom_call.1} parent=5 // pred_check_branch
        %255 = sbr.rel (%p253) target = $region44
      $region43: #{tpu_custom_call.1} parent=5 // pred_region
        // Predicated region
        $region45: #{tpu_custom_call.1} parent=43 // pred_check
          %p256 = pneg %p58
        $region46: #{tpu_custom_call.1} parent=43 // pred_check_branch
          %258 = sbr.rel (%p256) target = $region48
        $region47: #{tpu_custom_call.1} parent=43 // pred_region
          %p259 = scmp.lt.s32.totalorder %s17, 1
          %s260 = scalar_select %p259, %s17, 1
          %s261 = smul.addr %s260, 4
          %s262 = smul.addr %s261, 4
          %s263 = scalar_lea.vmem %s1, %s262
        $region48: #{tpu_custom_call.1} parent=43 // pred_fallthru
          _
      $region44: #{tpu_custom_call.1} parent=5 // pred_fallthru
        _
      %p264 = scmp.le.s32.totalorder 1, %s17
      %p265 = scmp.lt.s32.totalorder %s17, 3
      %p266 = pnand %p264, %p265
      %p267 = pneg %p266
      // Predicated region
      $region49: #{tpu_custom_call.1} parent=5 // pred_check
        _
      $region50: #{tpu_custom_call.1} parent=5 // pred_check_branch
        %269 = sbr.rel (%p266) target = $region52
      $region51: #{tpu_custom_call.1} parent=5 // pred_region
        %s270 = ssub.s32 %s17, 1
        %p271 = pneg %p38
        %p272 = pneg %p35
        %p273 = scmp.lt.s32.totalorder %s22, 1
        %s274 = scalar_select %p273, %s22, 1
        %s275 = smul.addr %s274, 4
        %s276 = smul.addr %s275, 4
        %s277 = scalar_lea.vmem %s1, %s276
        %p278 = pneg %p64
        %p279 = pneg %p61
        %p280 = pneg %p85
        %p281 = pneg %p82
        %p282 = pneg %p106
        %p283 = pneg %p103
        %p284 = pneg %p127
        %p285 = pneg %p124
        %p286 = pneg %p148
        %p287 = pneg %p145
        %p288 = pneg %p169
        %p289 = pneg %p166
        %p290 = pneg %p190
        %p291 = pneg %p187
        %p292 = pneg %p216
        %p293 = pneg %p213
        %s294 = sand.u32 %s203, 1
        %s295 = scalar_lea.sflag [#allocation4], %s294
        %s296 = sand.u32 %s203, 1
        %s297 = smul.addr %s296, 8
        %s298 = scalar_lea.vmem [#allocation3], %s297
        %p299 = scmp.lt.s32.totalorder %s22, 1
        %s300 = scalar_select %p299, %s22, 1
        %s301 = smul.addr %s300, 4
        %s302 = smul.addr %s301, 4
        %s303 = scalar_lea.vmem %s1, %s302
        %v304 = vld [vmem:[%s0] sm:$0x1]
        %v305 = vld [vmem:[%s303] sm:$0xf]
        %v306 = vld [vmem:[%s2] sm:$0xff]
        %s307 = scalar_lea.vmem %s303, 4
        %v308 = vld [vmem:[%s307] sm:$0xf]
        %s309 = scalar_lea.vmem %s2, 8
        %v310 = vld [vmem:[%s309] sm:$0xff]
        %vm311 = vcmask 31744
        %v313 = vsel %vm311, %v310, 0
        %vm315 = vcmask 1043456
        %v317 = vsel %vm315, %v308, 0
        %319 = vmatprep.subr.mxu0 0.0
        %320 = vmatpush1.msra.mxu0 0.0
        %321 = vmatprep.subr.mxu0 0.0
        %322 = vmatpush1.msra.mxu0 0.0
        %323 = vmatprep.subr.mxu0 0.0
        %324 = vmatpush1.msra.mxu0 0.0
        %325 = vmatprep.subr.mxu0 0.0
        %326 = vmatpush1.msra.mxu0 0.0
        %327 = vmatprep.subr.mxu0 0.0
        %328 = vmatpush1.msra.mxu0 0.0
        %329 = vmatprep.subr.mxu0 0.0
        %330 = vmatpush1.msra.mxu0 0.0
        %331 = vmatprep.subr.mxu0 0.0
        %332 = vmatpush1.msra.mxu0 0.0
        %333 = vmatprep.subr.mxu0 0.0
        %334 = vmatpush1.msra.mxu0 0.0
        %335 = vmatprep.subr.mxu0 0.0
        %336 = vmatpush1.msra.mxu0 0.0
        %337 = vmatprep.subr.mxu0 0.0
        %338 = vmatpush1.msra.mxu0 0.0
        %339 = vmatprep.subr.mxu0 0.0
        %340 = vmatpush1.msra.mxu0 0.0
        %341 = vmatprep.subr.mxu0 0.0
        %342 = vmatpush1.msra.mxu0 0.0
        %343 = vmatprep.subr.mxu0 0.0
        %344 = vmatpush1.msra.mxu0 0.0
        %345 = vmatprep.subr.mxu0 0.0
        %346 = vmatpush1.msra.mxu0 0.0
        %347 = vmatprep.subr.mxu0 0.0
        %348 = vmatpush1.msra.mxu0 0.0
        %349 = vmatprep.subr.mxu0 0.0
        %350 = vmatpush1.msra.mxu0 %v317
        %351 = vmatprep.subr.mxu0 0.0
        %352 = vmatpush2.msra.mxu0 0.0
        %353 = vmatprep.subr.mxu0 0.0
        %354 = vmatpush2.msra.mxu0 0.0
        %355 = vmatprep.subr.mxu0 0.0
        %356 = vmatpush2.msra.mxu0 0.0
        %357 = vmatprep.subr.mxu0 0.0
        %358 = vmatpush2.msra.mxu0 0.0
        %359 = vmatprep.subr.mxu0 0.0
        %360 = vmatpush2.msra.mxu0 0.0
        %361 = vmatprep.subr.mxu0 0.0
        %362 = vmatpush2.msra.mxu0 0.0
        %363 = vmatprep.subr.mxu0 0.0
        %364 = vmatpush2.msra.mxu0 0.0
        %365 = vmatprep.subr.mxu0 0.0
        %366 = vmatpush2.msra.mxu0 0.0
        %367 = vmatprep.subr.mxu0 0.0
        %368 = vmatpush2.msra.mxu0 0.0
        %369 = vmatprep.subr.mxu0 0.0
        %370 = vmatpush2.msra.mxu0 0.0
        %371 = vmatprep.subr.mxu0 0.0
        %372 = vmatpush2.msra.mxu0 0.0
        %373 = vmatprep.subr.mxu0 0.0
        %374 = vmatpush2.msra.mxu0 0.0
        %375 = vmatprep.subr.mxu0 0.0
        %376 = vmatpush2.msra.mxu0 0.0
        %377 = vmatprep.subr.mxu0 0.0
        %378 = vmatpush2.msra.mxu0 0.0
        %379 = vmatprep.subr.mxu0 0.0
        %380 = vmatpush2.msra.mxu0 0.0
        %381 = vmatprep.subr.mxu0 0.0
        %382 = vmatpush2.msra.mxu0 0.0
        %383 = vmatprep.mubr.f32.mxu0 0.0
        %384 = vmatmul.mubr.f32.gmra.mxu0 %v313
        %v385 = vpop.f32.mrf.mxu0
        %v386 = vadd.f32 0.0, %v385
        %v387 = vpop.f32.mrf.mxu0
        %388 = vdwg.mxu0
        %v390 = vsel %vm311, %v306, 0
        %v393 = vsel %vm315, %v305, 0
        %395 = vmatprep.subr.mxu0 0.0
        %396 = vmatpush1.msra.mxu0 0.0
        %397 = vmatprep.subr.mxu0 0.0
        %398 = vmatpush1.msra.mxu0 0.0
        %399 = vmatprep.subr.mxu0 0.0
        %400 = vmatpush1.msra.mxu0 0.0
        %401 = vmatprep.subr.mxu0 0.0
        %402 = vmatpush1.msra.mxu0 0.0
        %403 = vmatprep.subr.mxu0 0.0
        %404 = vmatpush1.msra.mxu0 0.0
        %405 = vmatprep.subr.mxu0 0.0
        %406 = vmatpush1.msra.mxu0 0.0
        %407 = vmatprep.subr.mxu0 0.0
        %408 = vmatpush1.msra.mxu0 0.0
        %409 = vmatprep.subr.mxu0 0.0
        %410 = vmatpush1.msra.mxu0 0.0
        %411 = vmatprep.subr.mxu0 0.0
        %412 = vmatpush1.msra.mxu0 0.0
        %413 = vmatprep.subr.mxu0 0.0
        %414 = vmatpush1.msra.mxu0 0.0
        %415 = vmatprep.subr.mxu0 0.0
        %416 = vmatpush1.msra.mxu0 0.0
        %417 = vmatprep.subr.mxu0 0.0
        %418 = vmatpush1.msra.mxu0 0.0
        %419 = vmatprep.subr.mxu0 0.0
        %420 = vmatpush1.msra.mxu0 0.0
        %421 = vmatprep.subr.mxu0 0.0
        %422 = vmatpush1.msra.mxu0 0.0
        %423 = vmatprep.subr.mxu0 0.0
        %424 = vmatpush1.msra.mxu0 0.0
        %425 = vmatprep.subr.mxu0 0.0
        %426 = vmatpush1.msra.mxu0 %v393
        %427 = vmatprep.subr.mxu0 0.0
        %428 = vmatpush2.msra.mxu0 0.0
        %429 = vmatprep.subr.mxu0 0.0
        %430 = vmatpush2.msra.mxu0 0.0
        %431 = vmatprep.subr.mxu0 0.0
        %432 = vmatpush2.msra.mxu0 0.0
        %433 = vmatprep.subr.mxu0 0.0
        %434 = vmatpush2.msra.mxu0 0.0
        %435 = vmatprep.subr.mxu0 0.0
        %436 = vmatpush2.msra.mxu0 0.0
        %437 = vmatprep.subr.mxu0 0.0
        %438 = vmatpush2.msra.mxu0 0.0
        %439 = vmatprep.subr.mxu0 0.0
        %440 = vmatpush2.msra.mxu0 0.0
        %441 = vmatprep.subr.mxu0 0.0
        %442 = vmatpush2.msra.mxu0 0.0
        %443 = vmatprep.subr.mxu0 0.0
        %444 = vmatpush2.msra.mxu0 0.0
        %445 = vmatprep.subr.mxu0 0.0
        %446 = vmatpush2.msra.mxu0 0.0
        %447 = vmatprep.subr.mxu0 0.0
        %448 = vmatpush2.msra.mxu0 0.0
        %449 = vmatprep.subr.mxu0 0.0
        %450 = vmatpush2.msra.mxu0 0.0
        %451 = vmatprep.subr.mxu0 0.0
        %452 = vmatpush2.msra.mxu0 0.0
        %453 = vmatprep.subr.mxu0 0.0
        %454 = vmatpush2.msra.mxu0 0.0
        %455 = vmatprep.subr.mxu0 0.0
        %456 = vmatpush2.msra.mxu0 0.0
        %457 = vmatprep.subr.mxu0 0.0
        %458 = vmatpush2.msra.mxu0 0.0
        %459 = vmatprep.mubr.f32.mxu0 0.0
        %460 = vmatmul.mubr.f32.gmra.mxu0 %v390
        %v461 = vpop.f32.mrf.mxu0
        %v462 = vadd.f32 %v386, %v461
        %v463 = vpop.f32.mrf.mxu0
        %464 = vdwg.mxu0
        %s465 = scalar_lea.vmem %s2, 16
        %v466 = vld [vmem:[%s465] sm:$0xff]
        %467 = vrot.lane.b32.xlu0 %v305, 127
        %v468 = vpop.permute.xlu0 %467
        %v470 = vsel %vm311, %v466, 0
        %v472 = vsel %vm315, %v468, 0
        %474 = vmatprep.subr.mxu0 0.0
        %475 = vmatpush1.msra.mxu0 0.0
        %476 = vmatprep.subr.mxu0 0.0
        %477 = vmatpush1.msra.mxu0 0.0
        %478 = vmatprep.subr.mxu0 0.0
        %479 = vmatpush1.msra.mxu0 0.0
        %480 = vmatprep.subr.mxu0 0.0
        %481 = vmatpush1.msra.mxu0 0.0
        %482 = vmatprep.subr.mxu0 0.0
        %483 = vmatpush1.msra.mxu0 0.0
        %484 = vmatprep.subr.mxu0 0.0
        %485 = vmatpush1.msra.mxu0 0.0
        %486 = vmatprep.subr.mxu0 0.0
        %487 = vmatpush1.msra.mxu0 0.0
        %488 = vmatprep.subr.mxu0 0.0
        %489 = vmatpush1.msra.mxu0 0.0
        %490 = vmatprep.subr.mxu0 0.0
        %491 = vmatpush1.msra.mxu0 0.0
        %492 = vmatprep.subr.mxu0 0.0
        %493 = vmatpush1.msra.mxu0 0.0
        %494 = vmatprep.subr.mxu0 0.0
        %495 = vmatpush1.msra.mxu0 0.0
        %496 = vmatprep.subr.mxu0 0.0
        %497 = vmatpush1.msra.mxu0 0.0
        %498 = vmatprep.subr.mxu0 0.0
        %499 = vmatpush1.msra.mxu0 0.0
        %500 = vmatprep.subr.mxu0 0.0
        %501 = vmatpush1.msra.mxu0 0.0
        %502 = vmatprep.subr.mxu0 0.0
        %503 = vmatpush1.msra.mxu0 0.0
        %504 = vmatprep.subr.mxu0 0.0
        %505 = vmatpush1.msra.mxu0 %v472
        %506 = vmatprep.subr.mxu0 0.0
        %507 = vmatpush2.msra.mxu0 0.0
        %508 = vmatprep.subr.mxu0 0.0
        %509 = vmatpush2.msra.mxu0 0.0
        %510 = vmatprep.subr.mxu0 0.0
        %511 = vmatpush2.msra.mxu0 0.0
        %512 = vmatprep.subr.mxu0 0.0
        %513 = vmatpush2.msra.mxu0 0.0
        %514 = vmatprep.subr.mxu0 0.0
        %515 = vmatpush2.msra.mxu0 0.0
        %516 = vmatprep.subr.mxu0 0.0
        %517 = vmatpush2.msra.mxu0 0.0
        %518 = vmatprep.subr.mxu0 0.0
        %519 = vmatpush2.msra.mxu0 0.0
        %520 = vmatprep.subr.mxu0 0.0
        %521 = vmatpush2.msra.mxu0 0.0
        %522 = vmatprep.subr.mxu0 0.0
        %523 = vmatpush2.msra.mxu0 0.0
        %524 = vmatprep.subr.mxu0 0.0
        %525 = vmatpush2.msra.mxu0 0.0
        %526 = vmatprep.subr.mxu0 0.0
        %527 = vmatpush2.msra.mxu0 0.0
        %528 = vmatprep.subr.mxu0 0.0
        %529 = vmatpush2.msra.mxu0 0.0
        %530 = vmatprep.subr.mxu0 0.0
        %531 = vmatpush2.msra.mxu0 0.0
        %532 = vmatprep.subr.mxu0 0.0
        %533 = vmatpush2.msra.mxu0 0.0
        %534 = vmatprep.subr.mxu0 0.0
        %535 = vmatpush2.msra.mxu0 0.0
        %536 = vmatprep.subr.mxu0 0.0
        %537 = vmatpush2.msra.mxu0 0.0
        %538 = vmatprep.mubr.f32.mxu0 0.0
        %539 = vmatmul.mubr.f32.gmra.mxu0 %v470
        %v540 = vpop.f32.mrf.mxu0
        %v541 = vadd.f32 0.0, %v540
        %v542 = vpop.f32.mrf.mxu0
        %543 = vdwg.mxu0
        %v544 = vadd.f32 %v462, %v541
        %s545 = scalar_lea.vmem %s303, 8
        %v546 = vld [vmem:[%s545] sm:$0xf]
        %s547 = scalar_lea.vmem %s2, 24
        %v548 = vld [vmem:[%s547] sm:$0xff]
        %v550 = vsel %vm311, %v548, 0
        %v553 = vsel %vm315, %v546, 0
        %555 = vmatprep.subr.mxu0 0.0
        %556 = vmatpush1.msra.mxu0 0.0
        %557 = vmatprep.subr.mxu0 0.0
        %558 = vmatpush1.msra.mxu0 0.0
        %559 = vmatprep.subr.mxu0 0.0
        %560 = vmatpush1.msra.mxu0 0.0
        %561 = vmatprep.subr.mxu0 0.0
        %562 = vmatpush1.msra.mxu0 0.0
        %563 = vmatprep.subr.mxu0 0.0
        %564 = vmatpush1.msra.mxu0 0.0
        %565 = vmatprep.subr.mxu0 0.0
        %566 = vmatpush1.msra.mxu0 0.0
        %567 = vmatprep.subr.mxu0 0.0
        %568 = vmatpush1.msra.mxu0 0.0
        %569 = vmatprep.subr.mxu0 0.0
        %570 = vmatpush1.msra.mxu0 0.0
        %571 = vmatprep.subr.mxu0 0.0
        %572 = vmatpush1.msra.mxu0 0.0
        %573 = vmatprep.subr.mxu0 0.0
        %574 = vmatpush1.msra.mxu0 0.0
        %575 = vmatprep.subr.mxu0 0.0
        %576 = vmatpush1.msra.mxu0 0.0
        %577 = vmatprep.subr.mxu0 0.0
        %578 = vmatpush1.msra.mxu0 0.0
        %579 = vmatprep.subr.mxu0 0.0
        %580 = vmatpush1.msra.mxu0 0.0
        %581 = vmatprep.subr.mxu0 0.0
        %582 = vmatpush1.msra.mxu0 0.0
        %583 = vmatprep.subr.mxu0 0.0
        %584 = vmatpush1.msra.mxu0 0.0
        %585 = vmatprep.subr.mxu0 0.0
        %586 = vmatpush1.msra.mxu0 %v553
        %587 = vmatprep.subr.mxu0 0.0
        %588 = vmatpush2.msra.mxu0 0.0
        %589 = vmatprep.subr.mxu0 0.0
        %590 = vmatpush2.msra.mxu0 0.0
        %591 = vmatprep.subr.mxu0 0.0
        %592 = vmatpush2.msra.mxu0 0.0
        %593 = vmatprep.subr.mxu0 0.0
        %594 = vmatpush2.msra.mxu0 0.0
        %595 = vmatprep.subr.mxu0 0.0
        %596 = vmatpush2.msra.mxu0 0.0
        %597 = vmatprep.subr.mxu0 0.0
        %598 = vmatpush2.msra.mxu0 0.0
        %599 = vmatprep.subr.mxu0 0.0
        %600 = vmatpush2.msra.mxu0 0.0
        %601 = vmatprep.subr.mxu0 0.0
        %602 = vmatpush2.msra.mxu0 0.0
        %603 = vmatprep.subr.mxu0 0.0
        %604 = vmatpush2.msra.mxu0 0.0
        %605 = vmatprep.subr.mxu0 0.0
        %606 = vmatpush2.msra.mxu0 0.0
        %607 = vmatprep.subr.mxu0 0.0
        %608 = vmatpush2.msra.mxu0 0.0
        %609 = vmatprep.subr.mxu0 0.0
        %610 = vmatpush2.msra.mxu0 0.0
        %611 = vmatprep.subr.mxu0 0.0
        %612 = vmatpush2.msra.mxu0 0.0
        %613 = vmatprep.subr.mxu0 0.0
        %614 = vmatpush2.msra.mxu0 0.0
        %615 = vmatprep.subr.mxu0 0.0
        %616 = vmatpush2.msra.mxu0 0.0
        %617 = vmatprep.subr.mxu0 0.0
        %618 = vmatpush2.msra.mxu0 0.0
        %619 = vmatprep.mubr.f32.mxu0 0.0
        %620 = vmatmul.mubr.f32.gmra.mxu0 %v550
        %v621 = vpop.f32.mrf.mxu0
        %v622 = vadd.f32 0.0, %v621
        %v623 = vpop.f32.mrf.mxu0
        %624 = vdwg.mxu0
        %v625 = vadd.f32 %v544, %v622
        %s626 = scalar_lea.vmem %s303, 12
        %v627 = vld [vmem:[%s626] sm:$0xf]
        %s628 = scalar_lea.vmem %s2, 32
        %v629 = vld [vmem:[%s628] sm:$0xff]
        %v631 = vsel %vm311, %v629, 0
        %v634 = vsel %vm315, %v627, 0
        %636 = vmatprep.subr.mxu0 0.0
        %637 = vmatpush1.msra.mxu0 0.0
        %638 = vmatprep.subr.mxu0 0.0
        %639 = vmatpush1.msra.mxu0 0.0
        %640 = vmatprep.subr.mxu0 0.0
        %641 = vmatpush1.msra.mxu0 0.0
        %642 = vmatprep.subr.mxu0 0.0
        %643 = vmatpush1.msra.mxu0 0.0
        %644 = vmatprep.subr.mxu0 0.0
        %645 = vmatpush1.msra.mxu0 0.0
        %646 = vmatprep.subr.mxu0 0.0
        %647 = vmatpush1.msra.mxu0 0.0
        %648 = vmatprep.subr.mxu0 0.0
        %649 = vmatpush1.msra.mxu0 0.0
        %650 = vmatprep.subr.mxu0 0.0
        %651 = vmatpush1.msra.mxu0 0.0
        %652 = vmatprep.subr.mxu0 0.0
        %653 = vmatpush1.msra.mxu0 0.0
        %654 = vmatprep.subr.mxu0 0.0
        %655 = vmatpush1.msra.mxu0 0.0
        %656 = vmatprep.subr.mxu0 0.0
        %657 = vmatpush1.msra.mxu0 0.0
        %658 = vmatprep.subr.mxu0 0.0
        %659 = vmatpush1.msra.mxu0 0.0
        %660 = vmatprep.subr.mxu0 0.0
        %661 = vmatpush1.msra.mxu0 0.0
        %662 = vmatprep.subr.mxu0 0.0
        %663 = vmatpush1.msra.mxu0 0.0
        %664 = vmatprep.subr.mxu0 0.0
        %665 = vmatpush1.msra.mxu0 0.0
        %666 = vmatprep.subr.mxu0 0.0
        %667 = vmatpush1.msra.mxu0 %v634
        %668 = vmatprep.subr.mxu0 0.0
        %669 = vmatpush2.msra.mxu0 0.0
        %670 = vmatprep.subr.mxu0 0.0
        %671 = vmatpush2.msra.mxu0 0.0
        %672 = vmatprep.subr.mxu0 0.0
        %673 = vmatpush2.msra.mxu0 0.0
        %674 = vmatprep.subr.mxu0 0.0
        %675 = vmatpush2.msra.mxu0 0.0
        %676 = vmatprep.subr.mxu0 0.0
        %677 = vmatpush2.msra.mxu0 0.0
        %678 = vmatprep.subr.mxu0 0.0
        %679 = vmatpush2.msra.mxu0 0.0
        %680 = vmatprep.subr.mxu0 0.0
        %681 = vmatpush2.msra.mxu0 0.0
        %682 = vmatprep.subr.mxu0 0.0
        %683 = vmatpush2.msra.mxu0 0.0
        %684 = vmatprep.subr.mxu0 0.0
        %685 = vmatpush2.msra.mxu0 0.0
        %686 = vmatprep.subr.mxu0 0.0
        %687 = vmatpush2.msra.mxu0 0.0
        %688 = vmatprep.subr.mxu0 0.0
        %689 = vmatpush2.msra.mxu0 0.0
        %690 = vmatprep.subr.mxu0 0.0
        %691 = vmatpush2.msra.mxu0 0.0
        %692 = vmatprep.subr.mxu0 0.0
        %693 = vmatpush2.msra.mxu0 0.0
        %694 = vmatprep.subr.mxu0 0.0
        %695 = vmatpush2.msra.mxu0 0.0
        %696 = vmatprep.subr.mxu0 0.0
        %697 = vmatpush2.msra.mxu0 0.0
        %698 = vmatprep.subr.mxu0 0.0
        %699 = vmatpush2.msra.mxu0 0.0
        %700 = vmatprep.mubr.f32.mxu0 0.0
        %701 = vmatmul.mubr.f32.gmra.mxu0 %v631
        %v702 = vpop.f32.mrf.mxu0
        %v703 = vadd.f32 0.0, %v702
        %v704 = vpop.f32.mrf.mxu0
        %705 = vdwg.mxu0
        %v706 = vadd.f32 %v625, %v703
        %s707 = scalar_lea.vmem %s2, 40
        %v708 = vld [vmem:[%s707] sm:$0xff]
        %709 = vrot.lane.b32.xlu0 %v546, 127
        %v710 = vpop.permute.xlu0 %709
        %v712 = vsel %vm311, %v708, 0
        %v714 = vsel %vm315, %v710, 0
        %716 = vmatprep.subr.mxu0 0.0
        %717 = vmatpush1.msra.mxu0 0.0
        %718 = vmatprep.subr.mxu0 0.0
        %719 = vmatpush1.msra.mxu0 0.0
        %720 = vmatprep.subr.mxu0 0.0
        %721 = vmatpush1.msra.mxu0 0.0
        %722 = vmatprep.subr.mxu0 0.0
        %723 = vmatpush1.msra.mxu0 0.0
        %724 = vmatprep.subr.mxu0 0.0
        %725 = vmatpush1.msra.mxu0 0.0
        %726 = vmatprep.subr.mxu0 0.0
        %727 = vmatpush1.msra.mxu0 0.0
        %728 = vmatprep.subr.mxu0 0.0
        %729 = vmatpush1.msra.mxu0 0.0
        %730 = vmatprep.subr.mxu0 0.0
        %731 = vmatpush1.msra.mxu0 0.0
        %732 = vmatprep.subr.mxu0 0.0
        %733 = vmatpush1.msra.mxu0 0.0
        %734 = vmatprep.subr.mxu0 0.0
        %735 = vmatpush1.msra.mxu0 0.0
        %736 = vmatprep.subr.mxu0 0.0
        %737 = vmatpush1.msra.mxu0 0.0
        %738 = vmatprep.subr.mxu0 0.0
        %739 = vmatpush1.msra.mxu0 0.0
        %740 = vmatprep.subr.mxu0 0.0
        %741 = vmatpush1.msra.mxu0 0.0
        %742 = vmatprep.subr.mxu0 0.0
        %743 = vmatpush1.msra.mxu0 0.0
        %744 = vmatprep.subr.mxu0 0.0
        %745 = vmatpush1.msra.mxu0 0.0
        %746 = vmatprep.subr.mxu0 0.0
        %747 = vmatpush1.msra.mxu0 %v714
        %748 = vmatprep.subr.mxu0 0.0
        %749 = vmatpush2.msra.mxu0 0.0
        %750 = vmatprep.subr.mxu0 0.0
        %751 = vmatpush2.msra.mxu0 0.0
        %752 = vmatprep.subr.mxu0 0.0
        %753 = vmatpush2.msra.mxu0 0.0
        %754 = vmatprep.subr.mxu0 0.0
        %755 = vmatpush2.msra.mxu0 0.0
        %756 = vmatprep.subr.mxu0 0.0
        %757 = vmatpush2.msra.mxu0 0.0
        %758 = vmatprep.subr.mxu0 0.0
        %759 = vmatpush2.msra.mxu0 0.0
        %760 = vmatprep.subr.mxu0 0.0
        %761 = vmatpush2.msra.mxu0 0.0
        %762 = vmatprep.subr.mxu0 0.0
        %763 = vmatpush2.msra.mxu0 0.0
        %764 = vmatprep.subr.mxu0 0.0
        %765 = vmatpush2.msra.mxu0 0.0
        %766 = vmatprep.subr.mxu0 0.0
        %767 = vmatpush2.msra.mxu0 0.0
        %768 = vmatprep.subr.mxu0 0.0
        %769 = vmatpush2.msra.mxu0 0.0
        %770 = vmatprep.subr.mxu0 0.0
        %771 = vmatpush2.msra.mxu0 0.0
        %772 = vmatprep.subr.mxu0 0.0
        %773 = vmatpush2.msra.mxu0 0.0
        %774 = vmatprep.subr.mxu0 0.0
        %775 = vmatpush2.msra.mxu0 0.0
        %776 = vmatprep.subr.mxu0 0.0
        %777 = vmatpush2.msra.mxu0 0.0
        %778 = vmatprep.subr.mxu0 0.0
        %779 = vmatpush2.msra.mxu0 0.0
        %780 = vmatprep.mubr.f32.mxu0 0.0
        %781 = vmatmul.mubr.f32.gmra.mxu0 %v712
        %v782 = vpop.f32.mrf.mxu0
        %v783 = vadd.f32 0.0, %v782
        %v784 = vpop.f32.mrf.mxu0
        %785 = vdwg.mxu0
        %v786 = vadd.f32 %v706, %v783
        %s787 = scalar_lea.vmem %s2, 48
        %v788 = vld [vmem:[%s787] sm:$0xff]
        %789 = vrot.lane.b32.xlu0 %v305, 118
        %v790 = vpop.permute.xlu0 %789
        %v792 = vsel %vm311, %v788, 0
        %v794 = vsel %vm315, %v790, 0
        %796 = vmatprep.subr.mxu0 0.0
        %797 = vmatpush1.msra.mxu0 0.0
        %798 = vmatprep.subr.mxu0 0.0
        %799 = vmatpush1.msra.mxu0 0.0
        %800 = vmatprep.subr.mxu0 0.0
        %801 = vmatpush1.msra.mxu0 0.0
        %802 = vmatprep.subr.mxu0 0.0
        %803 = vmatpush1.msra.mxu0 0.0
        %804 = vmatprep.subr.mxu0 0.0
        %805 = vmatpush1.msra.mxu0 0.0
        %806 = vmatprep.subr.mxu0 0.0
        %807 = vmatpush1.msra.mxu0 0.0
        %808 = vmatprep.subr.mxu0 0.0
        %809 = vmatpush1.msra.mxu0 0.0
        %810 = vmatprep.subr.mxu0 0.0
        %811 = vmatpush1.msra.mxu0 0.0
        %812 = vmatprep.subr.mxu0 0.0
        %813 = vmatpush1.msra.mxu0 0.0
        %814 = vmatprep.subr.mxu0 0.0
        %815 = vmatpush1.msra.mxu0 0.0
        %816 = vmatprep.subr.mxu0 0.0
        %817 = vmatpush1.msra.mxu0 0.0
        %818 = vmatprep.subr.mxu0 0.0
        %819 = vmatpush1.msra.mxu0 0.0
        %820 = vmatprep.subr.mxu0 0.0
        %821 = vmatpush1.msra.mxu0 0.0
        %822 = vmatprep.subr.mxu0 0.0
        %823 = vmatpush1.msra.mxu0 0.0
        %824 = vmatprep.subr.mxu0 0.0
        %825 = vmatpush1.msra.mxu0 0.0
        %826 = vmatprep.subr.mxu0 0.0
        %827 = vmatpush1.msra.mxu0 %v794
        %828 = vmatprep.subr.mxu0 0.0
        %829 = vmatpush2.msra.mxu0 0.0
        %830 = vmatprep.subr.mxu0 0.0
        %831 = vmatpush2.msra.mxu0 0.0
        %832 = vmatprep.subr.mxu0 0.0
        %833 = vmatpush2.msra.mxu0 0.0
        %834 = vmatprep.subr.mxu0 0.0
        %835 = vmatpush2.msra.mxu0 0.0
        %836 = vmatprep.subr.mxu0 0.0
        %837 = vmatpush2.msra.mxu0 0.0
        %838 = vmatprep.subr.mxu0 0.0
        %839 = vmatpush2.msra.mxu0 0.0
        %840 = vmatprep.subr.mxu0 0.0
        %841 = vmatpush2.msra.mxu0 0.0
        %842 = vmatprep.subr.mxu0 0.0
        %843 = vmatpush2.msra.mxu0 0.0
        %844 = vmatprep.subr.mxu0 0.0
        %845 = vmatpush2.msra.mxu0 0.0
        %846 = vmatprep.subr.mxu0 0.0
        %847 = vmatpush2.msra.mxu0 0.0
        %848 = vmatprep.subr.mxu0 0.0
        %849 = vmatpush2.msra.mxu0 0.0
        %850 = vmatprep.subr.mxu0 0.0
        %851 = vmatpush2.msra.mxu0 0.0
        %852 = vmatprep.subr.mxu0 0.0
        %853 = vmatpush2.msra.mxu0 0.0
        %854 = vmatprep.subr.mxu0 0.0
        %855 = vmatpush2.msra.mxu0 0.0
        %856 = vmatprep.subr.mxu0 0.0
        %857 = vmatpush2.msra.mxu0 0.0
        %858 = vmatprep.subr.mxu0 0.0
        %859 = vmatpush2.msra.mxu0 0.0
        %860 = vmatprep.mubr.f32.mxu0 0.0
        %861 = vmatmul.mubr.f32.gmra.mxu0 %v792
        %v862 = vpop.f32.mrf.mxu0
        %v863 = vadd.f32 0.0, %v862
        %v864 = vpop.f32.mrf.mxu0
        %865 = vdwg.mxu0
        %v866 = vadd.f32 %v786, %v863
        %s867 = scalar_lea.vmem %s2, 56
        %v868 = vld [vmem:[%s867] sm:$0xff]
        %869 = vrot.lane.b32.xlu0 %v308, 118
        %v870 = vpop.permute.xlu0 %869
        %v872 = vsel %vm311, %v868, 0
        %v874 = vsel %vm315, %v870, 0
        %876 = vmatprep.subr.mxu0 0.0
        %877 = vmatpush1.msra.mxu0 0.0
        %878 = vmatprep.subr.mxu0 0.0
        %879 = vmatpush1.msra.mxu0 0.0
        %880 = vmatprep.subr.mxu0 0.0
        %881 = vmatpush1.msra.mxu0 0.0
        %882 = vmatprep.subr.mxu0 0.0
        %883 = vmatpush1.msra.mxu0 0.0
        %884 = vmatprep.subr.mxu0 0.0
        %885 = vmatpush1.msra.mxu0 0.0
        %886 = vmatprep.subr.mxu0 0.0
        %887 = vmatpush1.msra.mxu0 0.0
        %888 = vmatprep.subr.mxu0 0.0
        %889 = vmatpush1.msra.mxu0 0.0
        %890 = vmatprep.subr.mxu0 0.0
        %891 = vmatpush1.msra.mxu0 0.0
        %892 = vmatprep.subr.mxu0 0.0
        %893 = vmatpush1.msra.mxu0 0.0
        %894 = vmatprep.subr.mxu0 0.0
        %895 = vmatpush1.msra.mxu0 0.0
        %896 = vmatprep.subr.mxu0 0.0
        %897 = vmatpush1.msra.mxu0 0.0
        %898 = vmatprep.subr.mxu0 0.0
        %899 = vmatpush1.msra.mxu0 0.0
        %900 = vmatprep.subr.mxu0 0.0
        %901 = vmatpush1.msra.mxu0 0.0
        %902 = vmatprep.subr.mxu0 0.0
        %903 = vmatpush1.msra.mxu0 0.0
        %904 = vmatprep.subr.mxu0 0.0
        %905 = vmatpush1.msra.mxu0 0.0
        %906 = vmatprep.subr.mxu0 0.0
        %907 = vmatpush1.msra.mxu0 %v874
        %908 = vmatprep.subr.mxu0 0.0
        %909 = vmatpush2.msra.mxu0 0.0
        %910 = vmatprep.subr.mxu0 0.0
        %911 = vmatpush2.msra.mxu0 0.0
        %912 = vmatprep.subr.mxu0 0.0
        %913 = vmatpush2.msra.mxu0 0.0
        %914 = vmatprep.subr.mxu0 0.0
        %915 = vmatpush2.msra.mxu0 0.0
        %916 = vmatprep.subr.mxu0 0.0
        %917 = vmatpush2.msra.mxu0 0.0
        %918 = vmatprep.subr.mxu0 0.0
        %919 = vmatpush2.msra.mxu0 0.0
        %920 = vmatprep.subr.mxu0 0.0
        %921 = vmatpush2.msra.mxu0 0.0
        %922 = vmatprep.subr.mxu0 0.0
        %923 = vmatpush2.msra.mxu0 0.0
        %924 = vmatprep.subr.mxu0 0.0
        %925 = vmatpush2.msra.mxu0 0.0
        %926 = vmatprep.subr.mxu0 0.0
        %927 = vmatpush2.msra.mxu0 0.0
        %928 = vmatprep.subr.mxu0 0.0
        %929 = vmatpush2.msra.mxu0 0.0
        %930 = vmatprep.subr.mxu0 0.0
        %931 = vmatpush2.msra.mxu0 0.0
        %932 = vmatprep.subr.mxu0 0.0
        %933 = vmatpush2.msra.mxu0 0.0
        %934 = vmatprep.subr.mxu0 0.0
        %935 = vmatpush2.msra.mxu0 0.0
        %936 = vmatprep.subr.mxu0 0.0
        %937 = vmatpush2.msra.mxu0 0.0
        %938 = vmatprep.subr.mxu0 0.0
        %939 = vmatpush2.msra.mxu0 0.0
        %940 = vmatprep.mubr.f32.mxu0 0.0
        %941 = vmatmul.mubr.f32.gmra.mxu0 %v872
        %v942 = vpop.f32.mrf.mxu0
        %v943 = vadd.f32 0.0, %v942
        %v944 = vpop.f32.mrf.mxu0
        %945 = vdwg.mxu0
        %v946 = vadd.f32 %v866, %v943
        %s947 = scalar_lea.vmem %s2, 64
        %v948 = vld [vmem:[%s947] sm:$0xff]
        %949 = vrot.lane.b32.xlu0 %v305, 117
        %v950 = vpop.permute.xlu0 %949
        %v952 = vsel %vm311, %v948, 0
        %v954 = vsel %vm315, %v950, 0
        %956 = vmatprep.subr.mxu0 0.0
        %957 = vmatpush1.msra.mxu0 0.0
        %958 = vmatprep.subr.mxu0 0.0
        %959 = vmatpush1.msra.mxu0 0.0
        %960 = vmatprep.subr.mxu0 0.0
        %961 = vmatpush1.msra.mxu0 0.0
        %962 = vmatprep.subr.mxu0 0.0
        %963 = vmatpush1.msra.mxu0 0.0
        %964 = vmatprep.subr.mxu0 0.0
        %965 = vmatpush1.msra.mxu0 0.0
        %966 = vmatprep.subr.mxu0 0.0
        %967 = vmatpush1.msra.mxu0 0.0
        %968 = vmatprep.subr.mxu0 0.0
        %969 = vmatpush1.msra.mxu0 0.0
        %970 = vmatprep.subr.mxu0 0.0
        %971 = vmatpush1.msra.mxu0 0.0
        %972 = vmatprep.subr.mxu0 0.0
        %973 = vmatpush1.msra.mxu0 0.0
        %974 = vmatprep.subr.mxu0 0.0
        %975 = vmatpush1.msra.mxu0 0.0
        %976 = vmatprep.subr.mxu0 0.0
        %977 = vmatpush1.msra.mxu0 0.0
        %978 = vmatprep.subr.mxu0 0.0
        %979 = vmatpush1.msra.mxu0 0.0
        %980 = vmatprep.subr.mxu0 0.0
        %981 = vmatpush1.msra.mxu0 0.0
        %982 = vmatprep.subr.mxu0 0.0
        %983 = vmatpush1.msra.mxu0 0.0
        %984 = vmatprep.subr.mxu0 0.0
        %985 = vmatpush1.msra.mxu0 0.0
        %986 = vmatprep.subr.mxu0 0.0
        %987 = vmatpush1.msra.mxu0 %v954
        %988 = vmatprep.subr.mxu0 0.0
        %989 = vmatpush2.msra.mxu0 0.0
        %990 = vmatprep.subr.mxu0 0.0
        %991 = vmatpush2.msra.mxu0 0.0
        %992 = vmatprep.subr.mxu0 0.0
        %993 = vmatpush2.msra.mxu0 0.0
        %994 = vmatprep.subr.mxu0 0.0
        %995 = vmatpush2.msra.mxu0 0.0
        %996 = vmatprep.subr.mxu0 0.0
        %997 = vmatpush2.msra.mxu0 0.0
        %998 = vmatprep.subr.mxu0 0.0
        %999 = vmatpush2.msra.mxu0 0.0
        %1000 = vmatprep.subr.mxu0 0.0
        %1001 = vmatpush2.msra.mxu0 0.0
        %1002 = vmatprep.subr.mxu0 0.0
        %1003 = vmatpush2.msra.mxu0 0.0
        %1004 = vmatprep.subr.mxu0 0.0
        %1005 = vmatpush2.msra.mxu0 0.0
        %1006 = vmatprep.subr.mxu0 0.0
        %1007 = vmatpush2.msra.mxu0 0.0
        %1008 = vmatprep.subr.mxu0 0.0
        %1009 = vmatpush2.msra.mxu0 0.0
        %1010 = vmatprep.subr.mxu0 0.0
        %1011 = vmatpush2.msra.mxu0 0.0
        %1012 = vmatprep.subr.mxu0 0.0
        %1013 = vmatpush2.msra.mxu0 0.0
        %1014 = vmatprep.subr.mxu0 0.0
        %1015 = vmatpush2.msra.mxu0 0.0
        %1016 = vmatprep.subr.mxu0 0.0
        %1017 = vmatpush2.msra.mxu0 0.0
        %1018 = vmatprep.subr.mxu0 0.0
        %1019 = vmatpush2.msra.mxu0 0.0
        %1020 = vmatprep.mubr.f32.mxu0 0.0
        %1021 = vmatmul.mubr.f32.gmra.mxu0 %v952
        %v1022 = vpop.f32.mrf.mxu0
        %v1023 = vadd.f32 0.0, %v1022
        %v1024 = vpop.f32.mrf.mxu0
        %1025 = vdwg.mxu0
        %v1026 = vadd.f32 %v946, %v1023
        %v1027 = vld [vmem:[%s3] sm:$0xff]
        %1029 = vset.pattern.permute.xlu0 0
        %1030 = vperm.xlu0 %1029, %v1027
        %v1031 = vpop.permute.xlu0 %1030
        %v1033 = vadd.f32 %v1026, %v1031
        %v1034 = vmax.f32 %v1033, 0.0
        %v1036 = vlaneseq
        %v1037 = vshrl.u32 %v1036, 7
        %v1038 = vsub.s32 0, %v1037
        %v1039 = vrot.slane %v304, %v1038
        %v1041 = vmul.f32 %v1034, %v1039
        %vm1042 = vcmask 998400
        %1043 = vst.msk [vmem:[#allocation2] sm:$0xff] %vm1042, 0.0
        %1045 = vrot.lane.b32.xlu0 %v1041, 11
        %v1046 = vpop.permute.xlu0 %1045
        %vm1048 = vcmask 908376
        %1049 = vst.msk [vmem:[#allocation2] sm:$0xff] %vm1048, %v1046
        %v1050 = vld [vmem:[%s4] sm:$0xff]
        %v1051 = vld [vmem:[#allocation2] sm:$0xff]
        %s1052 = scalar_lea.vmem %s4, 8
        %v1053 = vld [vmem:[%s1052] sm:$0xff]
        %1055 = vrot.lane.b32.xlu0 %v1051, 127
        %v1056 = vpop.permute.xlu0 %1055
        %vm1058 = vcmask 64512
        %v1060 = vsel %vm1058, %v1053, 0
        %1062 = vmatprep.subr.mxu0 0.0
        %1063 = vmatpush1.msra.mxu0 0.0
        %1064 = vmatprep.subr.mxu0 0.0
        %1065 = vmatpush1.msra.mxu0 0.0
        %1066 = vmatprep.subr.mxu0 0.0
        %1067 = vmatpush1.msra.mxu0 0.0
        %1068 = vmatprep.subr.mxu0 0.0
        %1069 = vmatpush1.msra.mxu0 0.0
        %1070 = vmatprep.subr.mxu0 0.0
        %1071 = vmatpush1.msra.mxu0 0.0
        %1072 = vmatprep.subr.mxu0 0.0
        %1073 = vmatpush1.msra.mxu0 0.0
        %1074 = vmatprep.subr.mxu0 0.0
        %1075 = vmatpush1.msra.mxu0 0.0
        %1076 = vmatprep.subr.mxu0 0.0
        %1077 = vmatpush1.msra.mxu0 0.0
        %1078 = vmatprep.subr.mxu0 0.0
        %1079 = vmatpush1.msra.mxu0 0.0
        %1080 = vmatprep.subr.mxu0 0.0
        %1081 = vmatpush1.msra.mxu0 0.0
        %1082 = vmatprep.subr.mxu0 0.0
        %1083 = vmatpush1.msra.mxu0 0.0
        %1084 = vmatprep.subr.mxu0 0.0
        %1085 = vmatpush1.msra.mxu0 0.0
        %1086 = vmatprep.subr.mxu0 0.0
        %1087 = vmatpush1.msra.mxu0 0.0
        %1088 = vmatprep.subr.mxu0 0.0
        %1089 = vmatpush1.msra.mxu0 0.0
        %1090 = vmatprep.subr.mxu0 0.0
        %1091 = vmatpush1.msra.mxu0 0.0
        %1092 = vmatprep.subr.mxu0 0.0
        %1093 = vmatpush1.msra.mxu0 %v1056
        %1094 = vmatprep.subr.mxu0 0.0
        %1095 = vmatpush2.msra.mxu0 0.0
        %1096 = vmatprep.subr.mxu0 0.0
        %1097 = vmatpush2.msra.mxu0 0.0
        %1098 = vmatprep.subr.mxu0 0.0
        %1099 = vmatpush2.msra.mxu0 0.0
        %1100 = vmatprep.subr.mxu0 0.0
        %1101 = vmatpush2.msra.mxu0 0.0
        %1102 = vmatprep.subr.mxu0 0.0
        %1103 = vmatpush2.msra.mxu0 0.0
        %1104 = vmatprep.subr.mxu0 0.0
        %1105 = vmatpush2.msra.mxu0 0.0
        %1106 = vmatprep.subr.mxu0 0.0
        %1107 = vmatpush2.msra.mxu0 0.0
        %1108 = vmatprep.subr.mxu0 0.0
        %1109 = vmatpush2.msra.mxu0 0.0
        %1110 = vmatprep.subr.mxu0 0.0
        %1111 = vmatpush2.msra.mxu0 0.0
        %1112 = vmatprep.subr.mxu0 0.0
        %1113 = vmatpush2.msra.mxu0 0.0
        %1114 = vmatprep.subr.mxu0 0.0
        %1115 = vmatpush2.msra.mxu0 0.0
        %1116 = vmatprep.subr.mxu0 0.0
        %1117 = vmatpush2.msra.mxu0 0.0
        %1118 = vmatprep.subr.mxu0 0.0
        %1119 = vmatpush2.msra.mxu0 0.0
        %1120 = vmatprep.subr.mxu0 0.0
        %1121 = vmatpush2.msra.mxu0 0.0
        %1122 = vmatprep.subr.mxu0 0.0
        %1123 = vmatpush2.msra.mxu0 0.0
        %1124 = vmatprep.subr.mxu0 0.0
        %1125 = vmatpush2.msra.mxu0 0.0
        %1126 = vmatprep.mubr.f32.mxu0 0.0
        %1127 = vmatmul.mubr.f32.gmra.mxu0 %v1060
        %v1128 = vpop.f32.mrf.mxu0
        %v1129 = vadd.f32 0.0, %v1128
        %v1130 = vpop.f32.mrf.mxu0
        %1131 = vdwg.mxu0
        %v1133 = vsel %vm1058, %v1050, 0
        %1135 = vmatprep.subr.mxu0 0.0
        %1136 = vmatpush1.msra.mxu0 0.0
        %1137 = vmatprep.subr.mxu0 0.0
        %1138 = vmatpush1.msra.mxu0 0.0
        %1139 = vmatprep.subr.mxu0 0.0
        %1140 = vmatpush1.msra.mxu0 0.0
        %1141 = vmatprep.subr.mxu0 0.0
        %1142 = vmatpush1.msra.mxu0 0.0
        %1143 = vmatprep.subr.mxu0 0.0
        %1144 = vmatpush1.msra.mxu0 0.0
        %1145 = vmatprep.subr.mxu0 0.0
        %1146 = vmatpush1.msra.mxu0 0.0
        %1147 = vmatprep.subr.mxu0 0.0
        %1148 = vmatpush1.msra.mxu0 0.0
        %1149 = vmatprep.subr.mxu0 0.0
        %1150 = vmatpush1.msra.mxu0 0.0
        %1151 = vmatprep.subr.mxu0 0.0
        %1152 = vmatpush1.msra.mxu0 0.0
        %1153 = vmatprep.subr.mxu0 0.0
        %1154 = vmatpush1.msra.mxu0 0.0
        %1155 = vmatprep.subr.mxu0 0.0
        %1156 = vmatpush1.msra.mxu0 0.0
        %1157 = vmatprep.subr.mxu0 0.0
        %1158 = vmatpush1.msra.mxu0 0.0
        %1159 = vmatprep.subr.mxu0 0.0
        %1160 = vmatpush1.msra.mxu0 0.0
        %1161 = vmatprep.subr.mxu0 0.0
        %1162 = vmatpush1.msra.mxu0 0.0
        %1163 = vmatprep.subr.mxu0 0.0
        %1164 = vmatpush1.msra.mxu0 0.0
        %1165 = vmatprep.subr.mxu0 0.0
        %1166 = vmatpush1.msra.mxu0 %v1051
        %1167 = vmatprep.subr.mxu0 0.0
        %1168 = vmatpush2.msra.mxu0 0.0
        %1169 = vmatprep.subr.mxu0 0.0
        %1170 = vmatpush2.msra.mxu0 0.0
        %1171 = vmatprep.subr.mxu0 0.0
        %1172 = vmatpush2.msra.mxu0 0.0
        %1173 = vmatprep.subr.mxu0 0.0
        %1174 = vmatpush2.msra.mxu0 0.0
        %1175 = vmatprep.subr.mxu0 0.0
        %1176 = vmatpush2.msra.mxu0 0.0
        %1177 = vmatprep.subr.mxu0 0.0
        %1178 = vmatpush2.msra.mxu0 0.0
        %1179 = vmatprep.subr.mxu0 0.0
        %1180 = vmatpush2.msra.mxu0 0.0
        %1181 = vmatprep.subr.mxu0 0.0
        %1182 = vmatpush2.msra.mxu0 0.0
        %1183 = vmatprep.subr.mxu0 0.0
        %1184 = vmatpush2.msra.mxu0 0.0
        %1185 = vmatprep.subr.mxu0 0.0
        %1186 = vmatpush2.msra.mxu0 0.0
        %1187 = vmatprep.subr.mxu0 0.0
        %1188 = vmatpush2.msra.mxu0 0.0
        %1189 = vmatprep.subr.mxu0 0.0
        %1190 = vmatpush2.msra.mxu0 0.0
        %1191 = vmatprep.subr.mxu0 0.0
        %1192 = vmatpush2.msra.mxu0 0.0
        %1193 = vmatprep.subr.mxu0 0.0
        %1194 = vmatpush2.msra.mxu0 0.0
        %1195 = vmatprep.subr.mxu0 0.0
        %1196 = vmatpush2.msra.mxu0 0.0
        %1197 = vmatprep.subr.mxu0 0.0
        %1198 = vmatpush2.msra.mxu0 0.0
        %1199 = vmatprep.mubr.f32.mxu0 0.0
        %1200 = vmatmul.mubr.f32.gmra.mxu0 %v1133
        %v1201 = vpop.f32.mrf.mxu0
        %v1202 = vadd.f32 %v1129, %v1201
        %v1203 = vpop.f32.mrf.mxu0
        %1204 = vdwg.mxu0
        %s1205 = scalar_lea.vmem %s4, 16
        %v1206 = vld [vmem:[%s1205] sm:$0xff]
        %1207 = vrot.lane.b32.xlu0 %v1051, 126
        %v1208 = vpop.permute.xlu0 %1207
        %v1211 = vsel %vm1058, %v1206, 0
        %1213 = vmatprep.subr.mxu0 0.0
        %1214 = vmatpush1.msra.mxu0 0.0
        %1215 = vmatprep.subr.mxu0 0.0
        %1216 = vmatpush1.msra.mxu0 0.0
        %1217 = vmatprep.subr.mxu0 0.0
        %1218 = vmatpush1.msra.mxu0 0.0
        %1219 = vmatprep.subr.mxu0 0.0
        %1220 = vmatpush1.msra.mxu0 0.0
        %1221 = vmatprep.subr.mxu0 0.0
        %1222 = vmatpush1.msra.mxu0 0.0
        %1223 = vmatprep.subr.mxu0 0.0
        %1224 = vmatpush1.msra.mxu0 0.0
        %1225 = vmatprep.subr.mxu0 0.0
        %1226 = vmatpush1.msra.mxu0 0.0
        %1227 = vmatprep.subr.mxu0 0.0
        %1228 = vmatpush1.msra.mxu0 0.0
        %1229 = vmatprep.subr.mxu0 0.0
        %1230 = vmatpush1.msra.mxu0 0.0
        %1231 = vmatprep.subr.mxu0 0.0
        %1232 = vmatpush1.msra.mxu0 0.0
        %1233 = vmatprep.subr.mxu0 0.0
        %1234 = vmatpush1.msra.mxu0 0.0
        %1235 = vmatprep.subr.mxu0 0.0
        %1236 = vmatpush1.msra.mxu0 0.0
        %1237 = vmatprep.subr.mxu0 0.0
        %1238 = vmatpush1.msra.mxu0 0.0
        %1239 = vmatprep.subr.mxu0 0.0
        %1240 = vmatpush1.msra.mxu0 0.0
        %1241 = vmatprep.subr.mxu0 0.0
        %1242 = vmatpush1.msra.mxu0 0.0
        %1243 = vmatprep.subr.mxu0 0.0
        %1244 = vmatpush1.msra.mxu0 %v1208
        %1245 = vmatprep.subr.mxu0 0.0
        %1246 = vmatpush2.msra.mxu0 0.0
        %1247 = vmatprep.subr.mxu0 0.0
        %1248 = vmatpush2.msra.mxu0 0.0
        %1249 = vmatprep.subr.mxu0 0.0
        %1250 = vmatpush2.msra.mxu0 0.0
        %1251 = vmatprep.subr.mxu0 0.0
        %1252 = vmatpush2.msra.mxu0 0.0
        %1253 = vmatprep.subr.mxu0 0.0
        %1254 = vmatpush2.msra.mxu0 0.0
        %1255 = vmatprep.subr.mxu0 0.0
        %1256 = vmatpush2.msra.mxu0 0.0
        %1257 = vmatprep.subr.mxu0 0.0
        %1258 = vmatpush2.msra.mxu0 0.0
        %1259 = vmatprep.subr.mxu0 0.0
        %1260 = vmatpush2.msra.mxu0 0.0
        %1261 = vmatprep.subr.mxu0 0.0
        %1262 = vmatpush2.msra.mxu0 0.0
        %1263 = vmatprep.subr.mxu0 0.0
        %1264 = vmatpush2.msra.mxu0 0.0
        %1265 = vmatprep.subr.mxu0 0.0
        %1266 = vmatpush2.msra.mxu0 0.0
        %1267 = vmatprep.subr.mxu0 0.0
        %1268 = vmatpush2.msra.mxu0 0.0
        %1269 = vmatprep.subr.mxu0 0.0
        %1270 = vmatpush2.msra.mxu0 0.0
        %1271 = vmatprep.subr.mxu0 0.0
        %1272 = vmatpush2.msra.mxu0 0.0
        %1273 = vmatprep.subr.mxu0 0.0
        %1274 = vmatpush2.msra.mxu0 0.0
        %1275 = vmatprep.subr.mxu0 0.0
        %1276 = vmatpush2.msra.mxu0 0.0
        %1277 = vmatprep.mubr.f32.mxu0 0.0
        %1278 = vmatmul.mubr.f32.gmra.mxu0 %v1211
        %v1279 = vpop.f32.mrf.mxu0
        %v1280 = vadd.f32 0.0, %v1279
        %v1281 = vpop.f32.mrf.mxu0
        %1282 = vdwg.mxu0
        %v1283 = vadd.f32 %v1202, %v1280
        %s1284 = scalar_lea.vmem %s4, 24
        %v1285 = vld [vmem:[%s1284] sm:$0xff]
        %1286 = vrot.lane.b32.xlu0 %v1051, 118
        %v1287 = vpop.permute.xlu0 %1286
        %v1290 = vsel %vm1058, %v1285, 0
        %1292 = vmatprep.subr.mxu0 0.0
        %1293 = vmatpush1.msra.mxu0 0.0
        %1294 = vmatprep.subr.mxu0 0.0
        %1295 = vmatpush1.msra.mxu0 0.0
        %1296 = vmatprep.subr.mxu0 0.0
        %1297 = vmatpush1.msra.mxu0 0.0
        %1298 = vmatprep.subr.mxu0 0.0
        %1299 = vmatpush1.msra.mxu0 0.0
        %1300 = vmatprep.subr.mxu0 0.0
        %1301 = vmatpush1.msra.mxu0 0.0
        %1302 = vmatprep.subr.mxu0 0.0
        %1303 = vmatpush1.msra.mxu0 0.0
        %1304 = vmatprep.subr.mxu0 0.0
        %1305 = vmatpush1.msra.mxu0 0.0
        %1306 = vmatprep.subr.mxu0 0.0
        %1307 = vmatpush1.msra.mxu0 0.0
        %1308 = vmatprep.subr.mxu0 0.0
        %1309 = vmatpush1.msra.mxu0 0.0
        %1310 = vmatprep.subr.mxu0 0.0
        %1311 = vmatpush1.msra.mxu0 0.0
        %1312 = vmatprep.subr.mxu0 0.0
        %1313 = vmatpush1.msra.mxu0 0.0
        %1314 = vmatprep.subr.mxu0 0.0
        %1315 = vmatpush1.msra.mxu0 0.0
        %1316 = vmatprep.subr.mxu0 0.0
        %1317 = vmatpush1.msra.mxu0 0.0
        %1318 = vmatprep.subr.mxu0 0.0
        %1319 = vmatpush1.msra.mxu0 0.0
        %1320 = vmatprep.subr.mxu0 0.0
        %1321 = vmatpush1.msra.mxu0 0.0
        %1322 = vmatprep.subr.mxu0 0.0
        %1323 = vmatpush1.msra.mxu0 %v1287
        %1324 = vmatprep.subr.mxu0 0.0
        %1325 = vmatpush2.msra.mxu0 0.0
        %1326 = vmatprep.subr.mxu0 0.0
        %1327 = vmatpush2.msra.mxu0 0.0
        %1328 = vmatprep.subr.mxu0 0.0
        %1329 = vmatpush2.msra.mxu0 0.0
        %1330 = vmatprep.subr.mxu0 0.0
        %1331 = vmatpush2.msra.mxu0 0.0
        %1332 = vmatprep.subr.mxu0 0.0
        %1333 = vmatpush2.msra.mxu0 0.0
        %1334 = vmatprep.subr.mxu0 0.0
        %1335 = vmatpush2.msra.mxu0 0.0
        %1336 = vmatprep.subr.mxu0 0.0
        %1337 = vmatpush2.msra.mxu0 0.0
        %1338 = vmatprep.subr.mxu0 0.0
        %1339 = vmatpush2.msra.mxu0 0.0
        %1340 = vmatprep.subr.mxu0 0.0
        %1341 = vmatpush2.msra.mxu0 0.0
        %1342 = vmatprep.subr.mxu0 0.0
        %1343 = vmatpush2.msra.mxu0 0.0
        %1344 = vmatprep.subr.mxu0 0.0
        %1345 = vmatpush2.msra.mxu0 0.0
        %1346 = vmatprep.subr.mxu0 0.0
        %1347 = vmatpush2.msra.mxu0 0.0
        %1348 = vmatprep.subr.mxu0 0.0
        %1349 = vmatpush2.msra.mxu0 0.0
        %1350 = vmatprep.subr.mxu0 0.0
        %1351 = vmatpush2.msra.mxu0 0.0
        %1352 = vmatprep.subr.mxu0 0.0
        %1353 = vmatpush2.msra.mxu0 0.0
        %1354 = vmatprep.subr.mxu0 0.0
        %1355 = vmatpush2.msra.mxu0 0.0
        %1356 = vmatprep.mubr.f32.mxu0 0.0
        %1357 = vmatmul.mubr.f32.gmra.mxu0 %v1290
        %v1358 = vpop.f32.mrf.mxu0
        %v1359 = vadd.f32 0.0, %v1358
        %v1360 = vpop.f32.mrf.mxu0
        %1361 = vdwg.mxu0
        %v1362 = vadd.f32 %v1283, %v1359
        %s1363 = scalar_lea.vmem %s4, 32
        %v1364 = vld [vmem:[%s1363] sm:$0xff]
        %1365 = vrot.lane.b32.xlu0 %v1051, 117
        %v1366 = vpop.permute.xlu0 %1365
        %v1369 = vsel %vm1058, %v1364, 0
        %1371 = vmatprep.subr.mxu0 0.0
        %1372 = vmatpush1.msra.mxu0 0.0
        %1373 = vmatprep.subr.mxu0 0.0
        %1374 = vmatpush1.msra.mxu0 0.0
        %1375 = vmatprep.subr.mxu0 0.0
        %1376 = vmatpush1.msra.mxu0 0.0
        %1377 = vmatprep.subr.mxu0 0.0
        %1378 = vmatpush1.msra.mxu0 0.0
        %1379 = vmatprep.subr.mxu0 0.0
        %1380 = vmatpush1.msra.mxu0 0.0
        %1381 = vmatprep.subr.mxu0 0.0
        %1382 = vmatpush1.msra.mxu0 0.0
        %1383 = vmatprep.subr.mxu0 0.0
        %1384 = vmatpush1.msra.mxu0 0.0
        %1385 = vmatprep.subr.mxu0 0.0
        %1386 = vmatpush1.msra.mxu0 0.0
        %1387 = vmatprep.subr.mxu0 0.0
        %1388 = vmatpush1.msra.mxu0 0.0
        %1389 = vmatprep.subr.mxu0 0.0
        %1390 = vmatpush1.msra.mxu0 0.0
        %1391 = vmatprep.subr.mxu0 0.0
        %1392 = vmatpush1.msra.mxu0 0.0
        %1393 = vmatprep.subr.mxu0 0.0
        %1394 = vmatpush1.msra.mxu0 0.0
        %1395 = vmatprep.subr.mxu0 0.0
        %1396 = vmatpush1.msra.mxu0 0.0
        %1397 = vmatprep.subr.mxu0 0.0
        %1398 = vmatpush1.msra.mxu0 0.0
        %1399 = vmatprep.subr.mxu0 0.0
        %1400 = vmatpush1.msra.mxu0 0.0
        %1401 = vmatprep.subr.mxu0 0.0
        %1402 = vmatpush1.msra.mxu0 %v1366
        %1403 = vmatprep.subr.mxu0 0.0
        %1404 = vmatpush2.msra.mxu0 0.0
        %1405 = vmatprep.subr.mxu0 0.0
        %1406 = vmatpush2.msra.mxu0 0.0
        %1407 = vmatprep.subr.mxu0 0.0
        %1408 = vmatpush2.msra.mxu0 0.0
        %1409 = vmatprep.subr.mxu0 0.0
        %1410 = vmatpush2.msra.mxu0 0.0
        %1411 = vmatprep.subr.mxu0 0.0
        %1412 = vmatpush2.msra.mxu0 0.0
        %1413 = vmatprep.subr.mxu0 0.0
        %1414 = vmatpush2.msra.mxu0 0.0
        %1415 = vmatprep.subr.mxu0 0.0
        %1416 = vmatpush2.msra.mxu0 0.0
        %1417 = vmatprep.subr.mxu0 0.0
        %1418 = vmatpush2.msra.mxu0 0.0
        %1419 = vmatprep.subr.mxu0 0.0
        %1420 = vmatpush2.msra.mxu0 0.0
        %1421 = vmatprep.subr.mxu0 0.0
        %1422 = vmatpush2.msra.mxu0 0.0
        %1423 = vmatprep.subr.mxu0 0.0
        %1424 = vmatpush2.msra.mxu0 0.0
        %1425 = vmatprep.subr.mxu0 0.0
        %1426 = vmatpush2.msra.mxu0 0.0
        %1427 = vmatprep.subr.mxu0 0.0
        %1428 = vmatpush2.msra.mxu0 0.0
        %1429 = vmatprep.subr.mxu0 0.0
        %1430 = vmatpush2.msra.mxu0 0.0
        %1431 = vmatprep.subr.mxu0 0.0
        %1432 = vmatpush2.msra.mxu0 0.0
        %1433 = vmatprep.subr.mxu0 0.0
        %1434 = vmatpush2.msra.mxu0 0.0
        %1435 = vmatprep.mubr.f32.mxu0 0.0
        %1436 = vmatmul.mubr.f32.gmra.mxu0 %v1369
        %v1437 = vpop.f32.mrf.mxu0
        %v1438 = vadd.f32 0.0, %v1437
        %v1439 = vpop.f32.mrf.mxu0
        %1440 = vdwg.mxu0
        %v1441 = vadd.f32 %v1362, %v1438
        %s1442 = scalar_lea.vmem %s4, 40
        %v1443 = vld [vmem:[%s1442] sm:$0xff]
        %1444 = vrot.lane.b32.xlu0 %v1051, 116
        %v1445 = vpop.permute.xlu0 %1444
        %v1448 = vsel %vm1058, %v1443, 0
        %1450 = vmatprep.subr.mxu0 0.0
        %1451 = vmatpush1.msra.mxu0 0.0
        %1452 = vmatprep.subr.mxu0 0.0
        %1453 = vmatpush1.msra.mxu0 0.0
        %1454 = vmatprep.subr.mxu0 0.0
        %1455 = vmatpush1.msra.mxu0 0.0
        %1456 = vmatprep.subr.mxu0 0.0
        %1457 = vmatpush1.msra.mxu0 0.0
        %1458 = vmatprep.subr.mxu0 0.0
        %1459 = vmatpush1.msra.mxu0 0.0
        %1460 = vmatprep.subr.mxu0 0.0
        %1461 = vmatpush1.msra.mxu0 0.0
        %1462 = vmatprep.subr.mxu0 0.0
        %1463 = vmatpush1.msra.mxu0 0.0
        %1464 = vmatprep.subr.mxu0 0.0
        %1465 = vmatpush1.msra.mxu0 0.0
        %1466 = vmatprep.subr.mxu0 0.0
        %1467 = vmatpush1.msra.mxu0 0.0
        %1468 = vmatprep.subr.mxu0 0.0
        %1469 = vmatpush1.msra.mxu0 0.0
        %1470 = vmatprep.subr.mxu0 0.0
        %1471 = vmatpush1.msra.mxu0 0.0
        %1472 = vmatprep.subr.mxu0 0.0
        %1473 = vmatpush1.msra.mxu0 0.0
        %1474 = vmatprep.subr.mxu0 0.0
        %1475 = vmatpush1.msra.mxu0 0.0
        %1476 = vmatprep.subr.mxu0 0.0
        %1477 = vmatpush1.msra.mxu0 0.0
        %1478 = vmatprep.subr.mxu0 0.0
        %1479 = vmatpush1.msra.mxu0 0.0
        %1480 = vmatprep.subr.mxu0 0.0
        %1481 = vmatpush1.msra.mxu0 %v1445
        %1482 = vmatprep.subr.mxu0 0.0
        %1483 = vmatpush2.msra.mxu0 0.0
        %1484 = vmatprep.subr.mxu0 0.0
        %1485 = vmatpush2.msra.mxu0 0.0
        %1486 = vmatprep.subr.mxu0 0.0
        %1487 = vmatpush2.msra.mxu0 0.0
        %1488 = vmatprep.subr.mxu0 0.0
        %1489 = vmatpush2.msra.mxu0 0.0
        %1490 = vmatprep.subr.mxu0 0.0
        %1491 = vmatpush2.msra.mxu0 0.0
        %1492 = vmatprep.subr.mxu0 0.0
        %1493 = vmatpush2.msra.mxu0 0.0
        %1494 = vmatprep.subr.mxu0 0.0
        %1495 = vmatpush2.msra.mxu0 0.0
        %1496 = vmatprep.subr.mxu0 0.0
        %1497 = vmatpush2.msra.mxu0 0.0
        %1498 = vmatprep.subr.mxu0 0.0
        %1499 = vmatpush2.msra.mxu0 0.0
        %1500 = vmatprep.subr.mxu0 0.0
        %1501 = vmatpush2.msra.mxu0 0.0
        %1502 = vmatprep.subr.mxu0 0.0
        %1503 = vmatpush2.msra.mxu0 0.0
        %1504 = vmatprep.subr.mxu0 0.0
        %1505 = vmatpush2.msra.mxu0 0.0
        %1506 = vmatprep.subr.mxu0 0.0
        %1507 = vmatpush2.msra.mxu0 0.0
        %1508 = vmatprep.subr.mxu0 0.0
        %1509 = vmatpush2.msra.mxu0 0.0
        %1510 = vmatprep.subr.mxu0 0.0
        %1511 = vmatpush2.msra.mxu0 0.0
        %1512 = vmatprep.subr.mxu0 0.0
        %1513 = vmatpush2.msra.mxu0 0.0
        %1514 = vmatprep.mubr.f32.mxu0 0.0
        %1515 = vmatmul.mubr.f32.gmra.mxu0 %v1448
        %v1516 = vpop.f32.mrf.mxu0
        %v1517 = vadd.f32 0.0, %v1516
        %v1518 = vpop.f32.mrf.mxu0
        %1519 = vdwg.mxu0
        %v1520 = vadd.f32 %v1441, %v1517
        %s1521 = scalar_lea.vmem %s4, 48
        %v1522 = vld [vmem:[%s1521] sm:$0xff]
        %1523 = vrot.lane.b32.xlu0 %v1051, 108
        %v1524 = vpop.permute.xlu0 %1523
        %v1527 = vsel %vm1058, %v1522, 0
        %1529 = vmatprep.subr.mxu0 0.0
        %1530 = vmatpush1.msra.mxu0 0.0
        %1531 = vmatprep.subr.mxu0 0.0
        %1532 = vmatpush1.msra.mxu0 0.0
        %1533 = vmatprep.subr.mxu0 0.0
        %1534 = vmatpush1.msra.mxu0 0.0
        %1535 = vmatprep.subr.mxu0 0.0
        %1536 = vmatpush1.msra.mxu0 0.0
        %1537 = vmatprep.subr.mxu0 0.0
        %1538 = vmatpush1.msra.mxu0 0.0
        %1539 = vmatprep.subr.mxu0 0.0
        %1540 = vmatpush1.msra.mxu0 0.0
        %1541 = vmatprep.subr.mxu0 0.0
        %1542 = vmatpush1.msra.mxu0 0.0
        %1543 = vmatprep.subr.mxu0 0.0
        %1544 = vmatpush1.msra.mxu0 0.0
        %1545 = vmatprep.subr.mxu0 0.0
        %1546 = vmatpush1.msra.mxu0 0.0
        %1547 = vmatprep.subr.mxu0 0.0
        %1548 = vmatpush1.msra.mxu0 0.0
        %1549 = vmatprep.subr.mxu0 0.0
        %1550 = vmatpush1.msra.mxu0 0.0
        %1551 = vmatprep.subr.mxu0 0.0
        %1552 = vmatpush1.msra.mxu0 0.0
        %1553 = vmatprep.subr.mxu0 0.0
        %1554 = vmatpush1.msra.mxu0 0.0
        %1555 = vmatprep.subr.mxu0 0.0
        %1556 = vmatpush1.msra.mxu0 0.0
        %1557 = vmatprep.subr.mxu0 0.0
        %1558 = vmatpush1.msra.mxu0 0.0
        %1559 = vmatprep.subr.mxu0 0.0
        %1560 = vmatpush1.msra.mxu0 %v1524
        %1561 = vmatprep.subr.mxu0 0.0
        %1562 = vmatpush2.msra.mxu0 0.0
        %1563 = vmatprep.subr.mxu0 0.0
        %1564 = vmatpush2.msra.mxu0 0.0
        %1565 = vmatprep.subr.mxu0 0.0
        %1566 = vmatpush2.msra.mxu0 0.0
        %1567 = vmatprep.subr.mxu0 0.0
        %1568 = vmatpush2.msra.mxu0 0.0
        %1569 = vmatprep.subr.mxu0 0.0
        %1570 = vmatpush2.msra.mxu0 0.0
        %1571 = vmatprep.subr.mxu0 0.0
        %1572 = vmatpush2.msra.mxu0 0.0
        %1573 = vmatprep.subr.mxu0 0.0
        %1574 = vmatpush2.msra.mxu0 0.0
        %1575 = vmatprep.subr.mxu0 0.0
        %1576 = vmatpush2.msra.mxu0 0.0
        %1577 = vmatprep.subr.mxu0 0.0
        %1578 = vmatpush2.msra.mxu0 0.0
        %1579 = vmatprep.subr.mxu0 0.0
        %1580 = vmatpush2.msra.mxu0 0.0
        %1581 = vmatprep.subr.mxu0 0.0
        %1582 = vmatpush2.msra.mxu0 0.0
        %1583 = vmatprep.subr.mxu0 0.0
        %1584 = vmatpush2.msra.mxu0 0.0
        %1585 = vmatprep.subr.mxu0 0.0
        %1586 = vmatpush2.msra.mxu0 0.0
        %1587 = vmatprep.subr.mxu0 0.0
        %1588 = vmatpush2.msra.mxu0 0.0
        %1589 = vmatprep.subr.mxu0 0.0
        %1590 = vmatpush2.msra.mxu0 0.0
        %1591 = vmatprep.subr.mxu0 0.0
        %1592 = vmatpush2.msra.mxu0 0.0
        %1593 = vmatprep.mubr.f32.mxu0 0.0
        %1594 = vmatmul.mubr.f32.gmra.mxu0 %v1527
        %v1595 = vpop.f32.mrf.mxu0
        %v1596 = vadd.f32 0.0, %v1595
        %v1597 = vpop.f32.mrf.mxu0
        %1598 = vdwg.mxu0
        %v1599 = vadd.f32 %v1520, %v1596
        %s1600 = scalar_lea.vmem %s4, 56
        %v1601 = vld [vmem:[%s1600] sm:$0xff]
        %1602 = vrot.lane.b32.xlu0 %v1051, 107
        %v1603 = vpop.permute.xlu0 %1602
        %v1606 = vsel %vm1058, %v1601, 0
        %1608 = vmatprep.subr.mxu0 0.0
        %1609 = vmatpush1.msra.mxu0 0.0
        %1610 = vmatprep.subr.mxu0 0.0
        %1611 = vmatpush1.msra.mxu0 0.0
        %1612 = vmatprep.subr.mxu0 0.0
        %1613 = vmatpush1.msra.mxu0 0.0
        %1614 = vmatprep.subr.mxu0 0.0
        %1615 = vmatpush1.msra.mxu0 0.0
        %1616 = vmatprep.subr.mxu0 0.0
        %1617 = vmatpush1.msra.mxu0 0.0
        %1618 = vmatprep.subr.mxu0 0.0
        %1619 = vmatpush1.msra.mxu0 0.0
        %1620 = vmatprep.subr.mxu0 0.0
        %1621 = vmatpush1.msra.mxu0 0.0
        %1622 = vmatprep.subr.mxu0 0.0
        %1623 = vmatpush1.msra.mxu0 0.0
        %1624 = vmatprep.subr.mxu0 0.0
        %1625 = vmatpush1.msra.mxu0 0.0
        %1626 = vmatprep.subr.mxu0 0.0
        %1627 = vmatpush1.msra.mxu0 0.0
        %1628 = vmatprep.subr.mxu0 0.0
        %1629 = vmatpush1.msra.mxu0 0.0
        %1630 = vmatprep.subr.mxu0 0.0
        %1631 = vmatpush1.msra.mxu0 0.0
        %1632 = vmatprep.subr.mxu0 0.0
        %1633 = vmatpush1.msra.mxu0 0.0
        %1634 = vmatprep.subr.mxu0 0.0
        %1635 = vmatpush1.msra.mxu0 0.0
        %1636 = vmatprep.subr.mxu0 0.0
        %1637 = vmatpush1.msra.mxu0 0.0
        %1638 = vmatprep.subr.mxu0 0.0
        %1639 = vmatpush1.msra.mxu0 %v1603
        %1640 = vmatprep.subr.mxu0 0.0
        %1641 = vmatpush2.msra.mxu0 0.0
        %1642 = vmatprep.subr.mxu0 0.0
        %1643 = vmatpush2.msra.mxu0 0.0
        %1644 = vmatprep.subr.mxu0 0.0
        %1645 = vmatpush2.msra.mxu0 0.0
        %1646 = vmatprep.subr.mxu0 0.0
        %1647 = vmatpush2.msra.mxu0 0.0
        %1648 = vmatprep.subr.mxu0 0.0
        %1649 = vmatpush2.msra.mxu0 0.0
        %1650 = vmatprep.subr.mxu0 0.0
        %1651 = vmatpush2.msra.mxu0 0.0
        %1652 = vmatprep.subr.mxu0 0.0
        %1653 = vmatpush2.msra.mxu0 0.0
        %1654 = vmatprep.subr.mxu0 0.0
        %1655 = vmatpush2.msra.mxu0 0.0
        %1656 = vmatprep.subr.mxu0 0.0
        %1657 = vmatpush2.msra.mxu0 0.0
        %1658 = vmatprep.subr.mxu0 0.0
        %1659 = vmatpush2.msra.mxu0 0.0
        %1660 = vmatprep.subr.mxu0 0.0
        %1661 = vmatpush2.msra.mxu0 0.0
        %1662 = vmatprep.subr.mxu0 0.0
        %1663 = vmatpush2.msra.mxu0 0.0
        %1664 = vmatprep.subr.mxu0 0.0
        %1665 = vmatpush2.msra.mxu0 0.0
        %1666 = vmatprep.subr.mxu0 0.0
        %1667 = vmatpush2.msra.mxu0 0.0
        %1668 = vmatprep.subr.mxu0 0.0
        %1669 = vmatpush2.msra.mxu0 0.0
        %1670 = vmatprep.subr.mxu0 0.0
        %1671 = vmatpush2.msra.mxu0 0.0
        %1672 = vmatprep.mubr.f32.mxu0 0.0
        %1673 = vmatmul.mubr.f32.gmra.mxu0 %v1606
        %v1674 = vpop.f32.mrf.mxu0
        %v1675 = vadd.f32 0.0, %v1674
        %v1676 = vpop.f32.mrf.mxu0
        %1677 = vdwg.mxu0
        %v1678 = vadd.f32 %v1599, %v1675
        %s1679 = scalar_lea.vmem %s4, 64
        %v1680 = vld [vmem:[%s1679] sm:$0xff]
        %1681 = vrot.lane.b32.xlu0 %v1051, 106
        %v1682 = vpop.permute.xlu0 %1681
        %v1685 = vsel %vm1058, %v1680, 0
        %1687 = vmatprep.subr.mxu0 0.0
        %1688 = vmatpush1.msra.mxu0 0.0
        %1689 = vmatprep.subr.mxu0 0.0
        %1690 = vmatpush1.msra.mxu0 0.0
        %1691 = vmatprep.subr.mxu0 0.0
        %1692 = vmatpush1.msra.mxu0 0.0
        %1693 = vmatprep.subr.mxu0 0.0
        %1694 = vmatpush1.msra.mxu0 0.0
        %1695 = vmatprep.subr.mxu0 0.0
        %1696 = vmatpush1.msra.mxu0 0.0
        %1697 = vmatprep.subr.mxu0 0.0
        %1698 = vmatpush1.msra.mxu0 0.0
        %1699 = vmatprep.subr.mxu0 0.0
        %1700 = vmatpush1.msra.mxu0 0.0
        %1701 = vmatprep.subr.mxu0 0.0
        %1702 = vmatpush1.msra.mxu0 0.0
        %1703 = vmatprep.subr.mxu0 0.0
        %1704 = vmatpush1.msra.mxu0 0.0
        %1705 = vmatprep.subr.mxu0 0.0
        %1706 = vmatpush1.msra.mxu0 0.0
        %1707 = vmatprep.subr.mxu0 0.0
        %1708 = vmatpush1.msra.mxu0 0.0
        %1709 = vmatprep.subr.mxu0 0.0
        %1710 = vmatpush1.msra.mxu0 0.0
        %1711 = vmatprep.subr.mxu0 0.0
        %1712 = vmatpush1.msra.mxu0 0.0
        %1713 = vmatprep.subr.mxu0 0.0
        %1714 = vmatpush1.msra.mxu0 0.0
        %1715 = vmatprep.subr.mxu0 0.0
        %1716 = vmatpush1.msra.mxu0 0.0
        %1717 = vmatprep.subr.mxu0 0.0
        %1718 = vmatpush1.msra.mxu0 %v1682
        %1719 = vmatprep.subr.mxu0 0.0
        %1720 = vmatpush2.msra.mxu0 0.0
        %1721 = vmatprep.subr.mxu0 0.0
        %1722 = vmatpush2.msra.mxu0 0.0
        %1723 = vmatprep.subr.mxu0 0.0
        %1724 = vmatpush2.msra.mxu0 0.0
        %1725 = vmatprep.subr.mxu0 0.0
        %1726 = vmatpush2.msra.mxu0 0.0
        %1727 = vmatprep.subr.mxu0 0.0
        %1728 = vmatpush2.msra.mxu0 0.0
        %1729 = vmatprep.subr.mxu0 0.0
        %1730 = vmatpush2.msra.mxu0 0.0
        %1731 = vmatprep.subr.mxu0 0.0
        %1732 = vmatpush2.msra.mxu0 0.0
        %1733 = vmatprep.subr.mxu0 0.0
        %1734 = vmatpush2.msra.mxu0 0.0
        %1735 = vmatprep.subr.mxu0 0.0
        %1736 = vmatpush2.msra.mxu0 0.0
        %1737 = vmatprep.subr.mxu0 0.0
        %1738 = vmatpush2.msra.mxu0 0.0
        %1739 = vmatprep.subr.mxu0 0.0
        %1740 = vmatpush2.msra.mxu0 0.0
        %1741 = vmatprep.subr.mxu0 0.0
        %1742 = vmatpush2.msra.mxu0 0.0
        %1743 = vmatprep.subr.mxu0 0.0
        %1744 = vmatpush2.msra.mxu0 0.0
        %1745 = vmatprep.subr.mxu0 0.0
        %1746 = vmatpush2.msra.mxu0 0.0
        %1747 = vmatprep.subr.mxu0 0.0
        %1748 = vmatpush2.msra.mxu0 0.0
        %1749 = vmatprep.subr.mxu0 0.0
        %1750 = vmatpush2.msra.mxu0 0.0
        %1751 = vmatprep.mubr.f32.mxu0 0.0
        %1752 = vmatmul.mubr.f32.gmra.mxu0 %v1685
        %v1753 = vpop.f32.mrf.mxu0
        %v1754 = vadd.f32 0.0, %v1753
        %v1755 = vpop.f32.mrf.mxu0
        %1756 = vdwg.mxu0
        %v1757 = vadd.f32 %v1678, %v1754
        %v1758 = vld [vmem:[%s5] sm:$0xff]
        %1760 = vset.pattern.permute.xlu0 0
        %1761 = vperm.xlu0 %1760, %v1758
        %v1762 = vpop.permute.xlu0 %1761
        %v1764 = vadd.f32 %v1757, %v1762
        %v1765 = vld [vmem:[%s626] sm:$0xf]
        %v1766 = vld [vmem:[%s6] sm:$0xff]
        %v1767 = vld [vmem:[%s7] sm:$0xff]
        %1769 = vset.pattern.permute.xlu0 0
        %1770 = vperm.xlu0 %1769, %v1767
        %v1771 = vpop.permute.xlu0 %1770
        %v1774 = vsel %vm311, %v1766, 0
        %v1777 = vsel %vm315, %v1765, 0
        %1779 = vmatprep.subr.mxu0 0.0
        %1780 = vmatpush1.msra.mxu0 0.0
        %1781 = vmatprep.subr.mxu0 0.0
        %1782 = vmatpush1.msra.mxu0 0.0
        %1783 = vmatprep.subr.mxu0 0.0
        %1784 = vmatpush1.msra.mxu0 0.0
        %1785 = vmatprep.subr.mxu0 0.0
        %1786 = vmatpush1.msra.mxu0 0.0
        %1787 = vmatprep.subr.mxu0 0.0
        %1788 = vmatpush1.msra.mxu0 0.0
        %1789 = vmatprep.subr.mxu0 0.0
        %1790 = vmatpush1.msra.mxu0 0.0
        %1791 = vmatprep.subr.mxu0 0.0
        %1792 = vmatpush1.msra.mxu0 0.0
        %1793 = vmatprep.subr.mxu0 0.0
        %1794 = vmatpush1.msra.mxu0 0.0
        %1795 = vmatprep.subr.mxu0 0.0
        %1796 = vmatpush1.msra.mxu0 0.0
        %1797 = vmatprep.subr.mxu0 0.0
        %1798 = vmatpush1.msra.mxu0 0.0
        %1799 = vmatprep.subr.mxu0 0.0
        %1800 = vmatpush1.msra.mxu0 0.0
        %1801 = vmatprep.subr.mxu0 0.0
        %1802 = vmatpush1.msra.mxu0 0.0
        %1803 = vmatprep.subr.mxu0 0.0
        %1804 = vmatpush1.msra.mxu0 0.0
        %1805 = vmatprep.subr.mxu0 0.0
        %1806 = vmatpush1.msra.mxu0 0.0
        %1807 = vmatprep.subr.mxu0 0.0
        %1808 = vmatpush1.msra.mxu0 0.0
        %1809 = vmatprep.subr.mxu0 0.0
        %1810 = vmatpush1.msra.mxu0 %v1777
        %1811 = vmatprep.subr.mxu0 0.0
        %1812 = vmatpush2.msra.mxu0 0.0
        %1813 = vmatprep.subr.mxu0 0.0
        %1814 = vmatpush2.msra.mxu0 0.0
        %1815 = vmatprep.subr.mxu0 0.0
        %1816 = vmatpush2.msra.mxu0 0.0
        %1817 = vmatprep.subr.mxu0 0.0
        %1818 = vmatpush2.msra.mxu0 0.0
        %1819 = vmatprep.subr.mxu0 0.0
        %1820 = vmatpush2.msra.mxu0 0.0
        %1821 = vmatprep.subr.mxu0 0.0
        %1822 = vmatpush2.msra.mxu0 0.0
        %1823 = vmatprep.subr.mxu0 0.0
        %1824 = vmatpush2.msra.mxu0 0.0
        %1825 = vmatprep.subr.mxu0 0.0
        %1826 = vmatpush2.msra.mxu0 0.0
        %1827 = vmatprep.subr.mxu0 0.0
        %1828 = vmatpush2.msra.mxu0 0.0
        %1829 = vmatprep.subr.mxu0 0.0
        %1830 = vmatpush2.msra.mxu0 0.0
        %1831 = vmatprep.subr.mxu0 0.0
        %1832 = vmatpush2.msra.mxu0 0.0
        %1833 = vmatprep.subr.mxu0 0.0
        %1834 = vmatpush2.msra.mxu0 0.0
        %1835 = vmatprep.subr.mxu0 0.0
        %1836 = vmatpush2.msra.mxu0 0.0
        %1837 = vmatprep.subr.mxu0 0.0
        %1838 = vmatpush2.msra.mxu0 0.0
        %1839 = vmatprep.subr.mxu0 0.0
        %1840 = vmatpush2.msra.mxu0 0.0
        %1841 = vmatprep.subr.mxu0 0.0
        %1842 = vmatpush2.msra.mxu0 0.0
        %1843 = vmatprep.mubr.f32.mxu0 0.0
        %1844 = vmatmul.mubr.f32.gmra.mxu0 %v1774
        %v1845 = vpop.f32.mrf.mxu0
        %v1846 = vadd.f32 %v1771, %v1845
        %v1847 = vpop.f32.mrf.mxu0
        %1848 = vdwg.mxu0
        %v1849 = vadd.f32 %v1764, %v1846
        %v1850 = vmax.f32 %v1849, 0.0
        %vm1851 = vcmask 818176
        %1852 = vst.msk [vmem:[%s298] sm:$0xff] %vm1851, %v1850
        %s1853 = sand.u32 %s203, 1
        %s1854 = scalar_lea.sflag [#allocation4], %s1853
        %s1855 = sand.u32 %s203, 1
        %s1856 = smul.addr %s1855, 8
        %s1857 = scalar_lea.vmem [#allocation3], %s1856
        // Predicated region
        $region53: #{tpu_custom_call.1} parent=51 // pred_check
          %p1858 = pneg %p213
        $region54: #{tpu_custom_call.1} parent=51 // pred_check_branch
          %1860 = sbr.rel (%p1858) target = $region56
        $region55: #{tpu_custom_call.1} parent=51 // pred_region
          %s1862 = ssub.s32 128, 128
          %1863 = vsyncadd %s1854, %s1862
          %s1864 = smul.addr %s22, 128
          %s1865 = scalar_lea.hbm %s8, %s1864
          %s1867 = sshll.u32 %s1857, 4
          %s1868 = int_to_ptr.vmem [resolvable:$true] %s1867
          %1870 = dma.vmem_to_hbm [thread:$0]  %s1868, 128, %s1865, %s1854
        $region56: #{tpu_custom_call.1} parent=51 // pred_fallthru
          _
      $region52: #{tpu_custom_call.1} parent=5 // pred_fallthru
        _
      %p1871 = scmp.le.s32.totalorder 2, %s17
      // Predicated region
      $region57: #{tpu_custom_call.1} parent=5 // pred_check
        %p1872 = pneg %p1871
      $region58: #{tpu_custom_call.1} parent=5 // pred_check_branch
        %1874 = sbr.rel (%p1872) target = $region60
      $region59: #{tpu_custom_call.1} parent=5 // pred_region
        %s1875 = ssub.s32 %s17, 2
        // Predicated region
        $region61: #{tpu_custom_call.1} parent=59 // pred_check
          %p1876 = pneg %p219
        $region62: #{tpu_custom_call.1} parent=59 // pred_check_branch
          %1878 = sbr.rel (%p1876) target = $region64
        $region63: #{tpu_custom_call.1} parent=59 // pred_region
          %s1879 = sand.u32 %s204, 1
          %s1880 = scalar_lea.sflag [#allocation4], %s1879
          %s1881 = sand.u32 %s204, 1
          %s1882 = smul.addr %s1881, 8
          %s1883 = scalar_lea.vmem [#allocation3], %s1882
          %1884 = dma.done %s1880, 128
        $region64: #{tpu_custom_call.1} parent=59 // pred_fallthru
          _
      $region60: #{tpu_custom_call.1} parent=5 // pred_fallthru
        _
    $region6: #{tpu_custom_call.1} parent=1 // loop_footer
      %s21 = sadd.s32 1, %s17
    $region7: #{tpu_custom_call.1} parent=1 // loop_footer_branch
      %16 = sbr.rel target = $region3
    $region8: #{tpu_custom_call.1} parent=1 // loop_exit
      _
    %1885 = vsyncpa [#allocation4], 1
    %s1886 = scalar_lea.sflag [#allocation4], 1
    %1887 = vsyncpa %s1886, 1

</llo_original>
